<compile_context>
chip_gen: v5e
topology: v5e:2x2
jax: 0.10.0
libtpu: 0.0.40
codegen_flags: <defaults>
</compile_context>

<pallas_src>
import math
from functools import partial

import jax
import jax.numpy as jnp
from jax.experimental import pallas as pl
from jax.experimental.pallas import tpu as pltpu


# ----------------------------------------------------------------------------
# Fused kernel: per-batch-row QKV projection + multi-head attention
# ----------------------------------------------------------------------------
def _mha_kernel(q_ref, k_ref, v_ref, w_ref, b_ref, m_ref, o_ref, *, num_heads):
    # Blocks:
    #   q/k/v : (1, S, D) bf16   activations
    #   w     : (3, D, D) bf16   pre-transposed [Wq^T * scale, Wk^T, Wv^T]
    #   b     : (3, 1, D) f32    [bq * scale, bk, bv]
    #   m     : (S, S)   int8    mask (1 == masked out)
    #   o     : (1, S, D) f32
    S = q_ref.shape[1]
    D = q_ref.shape[2]
    dh = D // num_heads

    # Additive mask bias expanded in-kernel: 0 keep / -1e30 masked.
    bias = m_ref[...].astype(jnp.float32) * jnp.float32(-1e30)        # (S, S)

    # Q/K/V projections (torch Linear: x @ W^T + b): bf16 MXU operands, f32
    # accumulation.  The attention scale is already folded into w_ref[0] /
    # b_ref[0], so the scores below come out pre-scaled.
    qp = (jnp.dot(q_ref[0], w_ref[0], preferred_element_type=jnp.float32)
          + b_ref[0]).astype(jnp.bfloat16)                            # (S, D)
    kp = (jnp.dot(k_ref[0], w_ref[1], preferred_element_type=jnp.float32)
          + b_ref[1]).astype(jnp.bfloat16)
    vp = (jnp.dot(v_ref[0], w_ref[2], preferred_element_type=jnp.float32)
          + b_ref[2]).astype(jnp.bfloat16)

    # Per-head attention; heads are static lane slices.  Each head writes its
    # (S, dh) result straight into the output tile (no list + concat).
    for h in range(num_heads):
        lo = h * dh
        qh = qp[:, lo:lo + dh]                                        # (S, dh)
        kh = kp[:, lo:lo + dh]
        vh = vp[:, lo:lo + dh]

        # Contract last dims of q and k (trans_b form): MXU consumes kh as-is,
        # no XLU transpose per head.
        s = jax.lax.dot_general(
            qh, kh, (((1,), (1,)), ((), ())),
            preferred_element_type=jnp.float32)                       # (S, S)
        s = s + bias                                                  # pre-scaled

        # Numerically stable softmax; denominator via EUP approx reciprocal.
        mrow = jnp.max(s, axis=-1, keepdims=True)
        p = jnp.exp(s - mrow)
        p = p * pl.reciprocal(jnp.sum(p, axis=-1, keepdims=True), approx=True)

        # TODO(synk): F.dropout(p=0.15) is identity here (eval mode);
        # training-mode dropout would need pltpu.prng_seed / prng_random_bits.

        o_ref[0, :, lo:lo + dh] = jnp.dot(
            p.astype(jnp.bfloat16), vh,
            preferred_element_type=jnp.float32).astype(o_ref.dtype)


@partial(jax.jit, static_argnames=("num_heads",))
def mha_forward(q, k, v, mask_bool, w_qkv_t, b_qkv, *, num_heads):
    B, S, D = q.shape
    # bf16 activations feeding the MXU (halves kernel DMA bytes + VMEM).
    qb = q.astype(jnp.bfloat16)
    kb = k.astype(jnp.bfloat16)
    vb = v.astype(jnp.bfloat16)
    # Mask as int8 (expanded to an additive bias inside the kernel).
    mask_i8 = mask_bool[0].astype(jnp.int8)                           # (S, S)

    row3 = lambda b: (b, 0, 0)
    const3 = lambda b: (0, 0, 0)
    const2 = lambda b: (0, 0)

    return pl.pallas_call(
        partial(_mha_kernel, num_heads=num_heads),
        out_shape=jax.ShapeDtypeStruct((B, S, D), jnp.float32),
        grid=(B,),
        in_specs=[
            pl.BlockSpec((1, S, D), row3),      # q (bf16)
            pl.BlockSpec((1, S, D), row3),      # k (bf16)
            pl.BlockSpec((1, S, D), row3),      # v (bf16)
            # Constant-index inputs stay VMEM-resident across the batch grid.
            # TODO(synk): at large D, add pipeline_mode=pl.Buffered(1) here so
            # resident weights are single-buffered (v7x 64 MiB VMEM budget).
            pl.BlockSpec((3, D, D), const3),    # packed W^T (bf16)
            pl.BlockSpec((3, 1, D), const3),    # packed biases (f32)
            pl.BlockSpec((S, S), const2),       # mask (int8)
        ],
        out_specs=pl.BlockSpec((1, S, D), row3),
        compiler_params=pltpu.CompilerParams(
            dimension_semantics=("parallel",)),  # one batch row per TC on v7x
    )(qb, kb, vb, w_qkv_t, b_qkv, mask_i8)
    # TODO(synk): for large S / d_model, switch to a query-row x KV-block
    # online-softmax tiling (and set vmem_limit_bytes) -- the flat (S, S)
    # softmax and full (1, S, D) blocks do not fit v7x's 64 MiB VMEM at scale.


# ----------------------------------------------------------------------------
# Module wrapper (parameter packing done once at init; forward is one kernel)
# ----------------------------------------------------------------------------
class MultiHeadAttentionPallas:
    def __init__(self, d_model, num_heads, rng_key):
        assert d_model % num_heads == 0
        self.d_model = d_model
        self.num_heads = num_heads
        dh = d_model // num_heads
        scale = 1.0 / math.sqrt(dh)

        kqw, kqb, kkw, kkb, kvw, kvb = jax.random.split(rng_key, 6)
        s = 0.05
        self.wq = s * jax.random.normal(kqw, (d_model, d_model), jnp.float32)
        self.bq = 0.01 * jax.random.normal(kqb, (d_model,), jnp.float32)
        self.wk = s * jax.random.normal(kkw, (d_model, d_model), jnp.float32)
        self.bk = 0.01 * jax.random.normal(kkb, (d_model,), jnp.float32)
        self.wv = s * jax.random.normal(kvw, (d_model, d_model), jnp.float32)
        self.bv = 0.01 * jax.random.normal(kvb, (d_model,), jnp.float32)

        # One-time kernel-side parameter packing:
        #  * pre-transpose (torch Linear computes x @ W^T),
        #  * fold the 1/sqrt(d_head) attention scale into the Q projection,
        #  * stack into one (3, D, D) bf16 block (single VMEM-resident DMA).
        self.w_qkv_t = jnp.stack(
            [self.wq.T * scale, self.wk.T, self.wv.T]).astype(jnp.bfloat16)
        self.b_qkv = jnp.stack(
            [self.bq * scale, self.bk, self.bv]).reshape(3, 1, d_model)  # f32

    def __call__(self, q, k, v, mask_bool):
        return mha_forward(q, k, v, mask_bool, self.w_qkv_t, self.b_qkv,
                           num_heads=self.num_heads)


# ----------------------------------------------------------------------------
# Pure-JAX f32 reference (mirrors the PyTorch module, eval mode)
# ----------------------------------------------------------------------------
def reference_forward(m, q, k, v, mask_bool):
    B, S, D = q.shape
    H = m.num_heads
    dh = D // H
    qp = q @ m.wq.T + m.bq
    kp = k @ m.wk.T + m.bk
    vp = v @ m.wv.T + m.bv
    qh = qp.reshape(B, S, H, dh).transpose(0, 2, 1, 3)
    kh = kp.reshape(B, S, H, dh).transpose(0, 2, 1, 3)
    vh = vp.reshape(B, S, H, dh).transpose(0, 2, 1, 3)
    scores = jnp.einsum("bhqd,bhkd->bhqk", qh, kh)
    scores = jnp.where(mask_bool[None, ...], -jnp.inf, scores)
    p = jax.nn.softmax(scores * (1.0 / math.sqrt(dh)), axis=-1)
    out = jnp.einsum("bhqk,bhkd->bhqd", p, vh)
    return out.transpose(0, 2, 1, 3).reshape(B, S, D)


if __name__ == "__main__":
    # batch, seq, num_heads, d_model  (d_head = 32) -- small but lane-dense
    B, S, H, D = 2, 64, 4, 128

    root = jax.random.PRNGKey(0)
    kq, kk, kv, kw = jax.random.split(root, 4)
    q = jax.random.normal(kq, (B, S, D), jnp.float32)
    k = jax.random.normal(kk, (B, S, D), jnp.float32)
    v = jax.random.normal(kv, (B, S, D), jnp.float32)
    # mask: True == masked-out (torch masked_fill semantics).  Strictly upper
    # triangular so every row keeps >=1 valid key (avoids all -inf NaN rows).
    mask = jnp.triu(jnp.ones((1, S, S), dtype=bool), k=1)

    model = MultiHeadAttentionPallas(D, H, kw)
    out = model(q, k, v, mask)
    jax.block_until_ready(out)

    ref = reference_forward(model, q, k, v, mask)
    assert out.shape == (B, S, D)
    # Tolerance accommodates bf16 MXU operands (f32 accumulation) plus the EUP
    # approximate reciprocal in the softmax denominator; expected error ~1e-3.
    assert jnp.allclose(out, ref, atol=1e-2, rtol=1e-2), "mismatch vs reference"

    print("KERNEL_OK")
</pallas_src>

<mosaic_0001>
module attributes {stable_mosaic.version = 11 : i64} {
  func.func @_mha_kernel(%arg0: i32, %arg1: memref<1x64x128xbf16, #tpu.memory_space<vmem>>, %arg2: memref<1x64x128xbf16, #tpu.memory_space<vmem>>, %arg3: memref<1x64x128xbf16, #tpu.memory_space<vmem>>, %arg4: memref<3x128x128xbf16, #tpu.memory_space<vmem>>, %arg5: memref<3x1x128xf32, #tpu.memory_space<vmem>>, %arg6: memref<64x64xi8, #tpu.memory_space<vmem>>, %arg7: memref<1x64x128xf32, #tpu.memory_space<vmem>>) attributes {dimension_semantics = [#tpu.dimension_semantics<parallel>], iteration_bounds = array<i64: 2>, scalar_prefetch = 0 : i64, scratch_operands = 0 : i64, tpu.core_type = #tpu.core_type<tc>, window_params = [{transform_indices = @transform_0, window_bounds = array<i64: 1, 64, 128>}, {transform_indices = @transform_1, window_bounds = array<i64: 1, 64, 128>}, {transform_indices = @transform_2, window_bounds = array<i64: 1, 64, 128>}, {pipeline_mode = #tpu.pipeline_mode<synchronous>, transform_indices = @transform_3, window_bounds = array<i64: 3, 128, 128>}, {pipeline_mode = #tpu.pipeline_mode<synchronous>, transform_indices = @transform_4, window_bounds = array<i64: 3, 1, 128>}, {pipeline_mode = #tpu.pipeline_mode<synchronous>, transform_indices = @transform_5, window_bounds = array<i64: 64, 64>}, {transform_indices = @transform_6, window_bounds = array<i64: 1, 64, 128>}]} {
    %c0 = arith.constant 0 : index
    %c0_0 = arith.constant 0 : index
    %0 = vector.load %arg6[%c0, %c0_0] : memref<64x64xi8, #tpu.memory_space<vmem>>, vector<64x64xi8>
    %1 = arith.sitofp %0 : vector<64x64xi8> to vector<64x64xf32>
    %cst = arith.constant -1.000000e+30 : f32
    %2 = vector.broadcast %cst : f32 to vector<64x64xf32>
    %3 = arith.mulf %1, %2 : vector<64x64xf32>
    %c0_1 = arith.constant 0 : index
    %c0_2 = arith.constant 0 : index
    %c0_3 = arith.constant 0 : index
    %4 = vector.load %arg1[%c0_1, %c0_2, %c0_3] : memref<1x64x128xbf16, #tpu.memory_space<vmem>>, vector<1x64x128xbf16>
    %5 = vector.shape_cast %4 : vector<1x64x128xbf16> to vector<64x128xbf16>
    %c0_4 = arith.constant 0 : index
    %c0_5 = arith.constant 0 : index
    %c0_6 = arith.constant 0 : index
    %6 = vector.load %arg4[%c0_4, %c0_5, %c0_6] : memref<3x128x128xbf16, #tpu.memory_space<vmem>>, vector<1x128x128xbf16>
    %7 = vector.shape_cast %6 : vector<1x128x128xbf16> to vector<128x128xbf16>
    %cst_7 = arith.constant dense<0.000000e+00> : vector<64x128xf32>
    %8 = tpu.matmul %5, %7, %cst_7 {dimension_numbers = #tpu.dot_dimension_numbers<[1], [0], [0], [1], [0, 0, 1, 1], [], []>} : vector<64x128xbf16>, vector<128x128xbf16>, vector<64x128xf32> -> vector<64x128xf32>
    %c0_8 = arith.constant 0 : index
    %c0_9 = arith.constant 0 : index
    %c0_10 = arith.constant 0 : index
    %9 = vector.load %arg5[%c0_8, %c0_9, %c0_10] : memref<3x1x128xf32, #tpu.memory_space<vmem>>, vector<1x1x128xf32>
    %10 = vector.shape_cast %9 : vector<1x1x128xf32> to vector<1x128xf32>
    %11 = vector.broadcast %10 : vector<1x128xf32> to vector<64x128xf32>
    %12 = arith.addf %8, %11 : vector<64x128xf32>
    %13 = arith.truncf %12 : vector<64x128xf32> to vector<64x128xbf16>
    %c0_11 = arith.constant 0 : index
    %c0_12 = arith.constant 0 : index
    %c0_13 = arith.constant 0 : index
    %14 = vector.load %arg2[%c0_11, %c0_12, %c0_13] : memref<1x64x128xbf16, #tpu.memory_space<vmem>>, vector<1x64x128xbf16>
    %15 = vector.shape_cast %14 : vector<1x64x128xbf16> to vector<64x128xbf16>
    %c1 = arith.constant 1 : index
    %c0_14 = arith.constant 0 : index
    %c0_15 = arith.constant 0 : index
    %16 = vector.load %arg4[%c1, %c0_14, %c0_15] : memref<3x128x128xbf16, #tpu.memory_space<vmem>>, vector<1x128x128xbf16>
    %17 = vector.shape_cast %16 : vector<1x128x128xbf16> to vector<128x128xbf16>
    %cst_16 = arith.constant dense<0.000000e+00> : vector<64x128xf32>
    %18 = tpu.matmul %15, %17, %cst_16 {dimension_numbers = #tpu.dot_dimension_numbers<[1], [0], [0], [1], [0, 0, 1, 1], [], []>} : vector<64x128xbf16>, vector<128x128xbf16>, vector<64x128xf32> -> vector<64x128xf32>
    %c1_17 = arith.constant 1 : index
    %c0_18 = arith.constant 0 : index
    %c0_19 = arith.constant 0 : index
    %19 = vector.load %arg5[%c1_17, %c0_18, %c0_19] : memref<3x1x128xf32, #tpu.memory_space<vmem>>, vector<1x1x128xf32>
    %20 = vector.shape_cast %19 : vector<1x1x128xf32> to vector<1x128xf32>
    %21 = vector.broadcast %20 : vector<1x128xf32> to vector<64x128xf32>
    %22 = arith.addf %18, %21 : vector<64x128xf32>
    %23 = arith.truncf %22 : vector<64x128xf32> to vector<64x128xbf16>
    %c0_20 = arith.constant 0 : index
    %c0_21 = arith.constant 0 : index
    %c0_22 = arith.constant 0 : index
    %24 = vector.load %arg3[%c0_20, %c0_21, %c0_22] : memref<1x64x128xbf16, #tpu.memory_space<vmem>>, vector<1x64x128xbf16>
    %25 = vector.shape_cast %24 : vector<1x64x128xbf16> to vector<64x128xbf16>
    %c2 = arith.constant 2 : index
    %c0_23 = arith.constant 0 : index
    %c0_24 = arith.constant 0 : index
    %26 = vector.load %arg4[%c2, %c0_23, %c0_24] : memref<3x128x128xbf16, #tpu.memory_space<vmem>>, vector<1x128x128xbf16>
    %27 = vector.shape_cast %26 : vector<1x128x128xbf16> to vector<128x128xbf16>
    %cst_25 = arith.constant dense<0.000000e+00> : vector<64x128xf32>
    %28 = tpu.matmul %25, %27, %cst_25 {dimension_numbers = #tpu.dot_dimension_numbers<[1], [0], [0], [1], [0, 0, 1, 1], [], []>} : vector<64x128xbf16>, vector<128x128xbf16>, vector<64x128xf32> -> vector<64x128xf32>
    %c2_26 = arith.constant 2 : index
    %c0_27 = arith.constant 0 : index
    %c0_28 = arith.constant 0 : index
    %29 = vector.load %arg5[%c2_26, %c0_27, %c0_28] : memref<3x1x128xf32, #tpu.memory_space<vmem>>, vector<1x1x128xf32>
    %30 = vector.shape_cast %29 : vector<1x1x128xf32> to vector<1x128xf32>
    %31 = vector.broadcast %30 : vector<1x128xf32> to vector<64x128xf32>
    %32 = arith.addf %28, %31 : vector<64x128xf32>
    %33 = arith.truncf %32 : vector<64x128xf32> to vector<64x128xbf16>
    %34 = vector.extract_strided_slice %13 {offsets = [0, 0], sizes = [64, 32], strides = [1, 1]} : vector<64x128xbf16> to vector<64x32xbf16>
    %35 = vector.extract_strided_slice %23 {offsets = [0, 0], sizes = [64, 32], strides = [1, 1]} : vector<64x128xbf16> to vector<64x32xbf16>
    %36 = vector.extract_strided_slice %33 {offsets = [0, 0], sizes = [64, 32], strides = [1, 1]} : vector<64x128xbf16> to vector<64x32xbf16>
    %cst_29 = arith.constant dense<0.000000e+00> : vector<64x64xf32>
    %37 = tpu.matmul %34, %35, %cst_29 {dimension_numbers = #tpu.dot_dimension_numbers<[1], [1], [0], [0], [0, 0, 1, 0], [], []>} : vector<64x32xbf16>, vector<64x32xbf16>, vector<64x64xf32> -> vector<64x64xf32>
    %38 = arith.addf %37, %3 : vector<64x64xf32>
    %cst_30 = arith.constant dense<0xFF800000> : vector<64xf32>
    %39 = vector.multi_reduction <maximumf>, %38, %cst_30 [1] : vector<64x64xf32> to vector<64xf32>
    %40 = vector.shape_cast %39 : vector<64xf32> to vector<64x1xf32>
    %41 = vector.broadcast %40 : vector<64x1xf32> to vector<64x64xf32>
    %42 = arith.subf %38, %41 : vector<64x64xf32>
    %43 = math.exp %42 : vector<64x64xf32>
    %cst_31 = arith.constant dense<0.000000e+00> : vector<64xf32>
    %44 = vector.multi_reduction <add>, %43, %cst_31 [1] : vector<64x64xf32> to vector<64xf32>
    %45 = vector.shape_cast %44 : vector<64xf32> to vector<64x1xf32>
    %46 = tpu.reciprocal %45 {approx = true} : vector<64x1xf32> -> vector<64x1xf32>
    %47 = vector.broadcast %46 : vector<64x1xf32> to vector<64x64xf32>
    %48 = arith.mulf %43, %47 : vector<64x64xf32>
    %49 = arith.truncf %48 : vector<64x64xf32> to vector<64x64xbf16>
    %cst_32 = arith.constant dense<0.000000e+00> : vector<64x32xf32>
    %50 = tpu.matmul %49, %36, %cst_32 {dimension_numbers = #tpu.dot_dimension_numbers<[1], [0], [0], [1], [0, 0, 1, 1], [], []>} : vector<64x64xbf16>, vector<64x32xbf16>, vector<64x32xf32> -> vector<64x32xf32>
    %c0_33 = arith.constant 0 : index
    %c0_34 = arith.constant 0 : index
    %c0_35 = arith.constant 0 : index
    %51 = vector.load %arg7[%c0_33, %c0_34, %c0_35] : memref<1x64x128xf32, #tpu.memory_space<vmem>>, vector<1x64x32xf32>
    %52 = vector.shape_cast %51 : vector<1x64x32xf32> to vector<64x32xf32>
    %53 = vector.shape_cast %50 : vector<64x32xf32> to vector<1x64x32xf32>
    tpu.vector_store %arg7[%c0_33, %c0_34, %c0_35], %53 {strides = array<i32>} : memref<1x64x128xf32, #tpu.memory_space<vmem>>, vector<1x64x32xf32>,
    %54 = vector.extract_strided_slice %13 {offsets = [0, 32], sizes = [64, 32], strides = [1, 1]} : vector<64x128xbf16> to vector<64x32xbf16>
    %55 = vector.extract_strided_slice %23 {offsets = [0, 32], sizes = [64, 32], strides = [1, 1]} : vector<64x128xbf16> to vector<64x32xbf16>
    %56 = vector.extract_strided_slice %33 {offsets = [0, 32], sizes = [64, 32], strides = [1, 1]} : vector<64x128xbf16> to vector<64x32xbf16>
    %cst_36 = arith.constant dense<0.000000e+00> : vector<64x64xf32>
    %57 = tpu.matmul %54, %55, %cst_36 {dimension_numbers = #tpu.dot_dimension_numbers<[1], [1], [0], [0], [0, 0, 1, 0], [], []>} : vector<64x32xbf16>, vector<64x32xbf16>, vector<64x64xf32> -> vector<64x64xf32>
    %58 = arith.addf %57, %3 : vector<64x64xf32>
    %cst_37 = arith.constant dense<0xFF800000> : vector<64xf32>
    %59 = vector.multi_reduction <maximumf>, %58, %cst_37 [1] : vector<64x64xf32> to vector<64xf32>
    %60 = vector.shape_cast %59 : vector<64xf32> to vector<64x1xf32>
    %61 = vector.broadcast %60 : vector<64x1xf32> to vector<64x64xf32>
    %62 = arith.subf %58, %61 : vector<64x64xf32>
    %63 = math.exp %62 : vector<64x64xf32>
    %cst_38 = arith.constant dense<0.000000e+00> : vector<64xf32>
    %64 = vector.multi_reduction <add>, %63, %cst_38 [1] : vector<64x64xf32> to vector<64xf32>
    %65 = vector.shape_cast %64 : vector<64xf32> to vector<64x1xf32>
    %66 = tpu.reciprocal %65 {approx = true} : vector<64x1xf32> -> vector<64x1xf32>
    %67 = vector.broadcast %66 : vector<64x1xf32> to vector<64x64xf32>
    %68 = arith.mulf %63, %67 : vector<64x64xf32>
    %69 = arith.truncf %68 : vector<64x64xf32> to vector<64x64xbf16>
    %cst_39 = arith.constant dense<0.000000e+00> : vector<64x32xf32>
    %70 = tpu.matmul %69, %56, %cst_39 {dimension_numbers = #tpu.dot_dimension_numbers<[1], [0], [0], [1], [0, 0, 1, 1], [], []>} : vector<64x64xbf16>, vector<64x32xbf16>, vector<64x32xf32> -> vector<64x32xf32>
    %c0_40 = arith.constant 0 : index
    %c0_41 = arith.constant 0 : index
    %c32 = arith.constant 32 : index
    %71 = vector.load %arg7[%c0_40, %c0_41, %c32] : memref<1x64x128xf32, #tpu.memory_space<vmem>>, vector<1x64x32xf32>
    %72 = vector.shape_cast %71 : vector<1x64x32xf32> to vector<64x32xf32>
    %73 = vector.shape_cast %70 : vector<64x32xf32> to vector<1x64x32xf32>
    tpu.vector_store %arg7[%c0_40, %c0_41, %c32], %73 {strides = array<i32>} : memref<1x64x128xf32, #tpu.memory_space<vmem>>, vector<1x64x32xf32>,
    %74 = vector.extract_strided_slice %13 {offsets = [0, 64], sizes = [64, 32], strides = [1, 1]} : vector<64x128xbf16> to vector<64x32xbf16>
    %75 = vector.extract_strided_slice %23 {offsets = [0, 64], sizes = [64, 32], strides = [1, 1]} : vector<64x128xbf16> to vector<64x32xbf16>
    %76 = vector.extract_strided_slice %33 {offsets = [0, 64], sizes = [64, 32], strides = [1, 1]} : vector<64x128xbf16> to vector<64x32xbf16>
    %cst_42 = arith.constant dense<0.000000e+00> : vector<64x64xf32>
    %77 = tpu.matmul %74, %75, %cst_42 {dimension_numbers = #tpu.dot_dimension_numbers<[1], [1], [0], [0], [0, 0, 1, 0], [], []>} : vector<64x32xbf16>, vector<64x32xbf16>, vector<64x64xf32> -> vector<64x64xf32>
    %78 = arith.addf %77, %3 : vector<64x64xf32>
    %cst_43 = arith.constant dense<0xFF800000> : vector<64xf32>
    %79 = vector.multi_reduction <maximumf>, %78, %cst_43 [1] : vector<64x64xf32> to vector<64xf32>
    %80 = vector.shape_cast %79 : vector<64xf32> to vector<64x1xf32>
    %81 = vector.broadcast %80 : vector<64x1xf32> to vector<64x64xf32>
    %82 = arith.subf %78, %81 : vector<64x64xf32>
    %83 = math.exp %82 : vector<64x64xf32>
    %cst_44 = arith.constant dense<0.000000e+00> : vector<64xf32>
    %84 = vector.multi_reduction <add>, %83, %cst_44 [1] : vector<64x64xf32> to vector<64xf32>
    %85 = vector.shape_cast %84 : vector<64xf32> to vector<64x1xf32>
    %86 = tpu.reciprocal %85 {approx = true} : vector<64x1xf32> -> vector<64x1xf32>
    %87 = vector.broadcast %86 : vector<64x1xf32> to vector<64x64xf32>
    %88 = arith.mulf %83, %87 : vector<64x64xf32>
    %89 = arith.truncf %88 : vector<64x64xf32> to vector<64x64xbf16>
    %cst_45 = arith.constant dense<0.000000e+00> : vector<64x32xf32>
    %90 = tpu.matmul %89, %76, %cst_45 {dimension_numbers = #tpu.dot_dimension_numbers<[1], [0], [0], [1], [0, 0, 1, 1], [], []>} : vector<64x64xbf16>, vector<64x32xbf16>, vector<64x32xf32> -> vector<64x32xf32>
    %c0_46 = arith.constant 0 : index
    %c0_47 = arith.constant 0 : index
    %c64 = arith.constant 64 : index
    %91 = vector.load %arg7[%c0_46, %c0_47, %c64] : memref<1x64x128xf32, #tpu.memory_space<vmem>>, vector<1x64x32xf32>
    %92 = vector.shape_cast %91 : vector<1x64x32xf32> to vector<64x32xf32>
    %93 = vector.shape_cast %90 : vector<64x32xf32> to vector<1x64x32xf32>
    tpu.vector_store %arg7[%c0_46, %c0_47, %c64], %93 {strides = array<i32>} : memref<1x64x128xf32, #tpu.memory_space<vmem>>, vector<1x64x32xf32>,
    %94 = vector.extract_strided_slice %13 {offsets = [0, 96], sizes = [64, 32], strides = [1, 1]} : vector<64x128xbf16> to vector<64x32xbf16>
    %95 = vector.extract_strided_slice %23 {offsets = [0, 96], sizes = [64, 32], strides = [1, 1]} : vector<64x128xbf16> to vector<64x32xbf16>
    %96 = vector.extract_strided_slice %33 {offsets = [0, 96], sizes = [64, 32], strides = [1, 1]} : vector<64x128xbf16> to vector<64x32xbf16>
    %cst_48 = arith.constant dense<0.000000e+00> : vector<64x64xf32>
    %97 = tpu.matmul %94, %95, %cst_48 {dimension_numbers = #tpu.dot_dimension_numbers<[1], [1], [0], [0], [0, 0, 1, 0], [], []>} : vector<64x32xbf16>, vector<64x32xbf16>, vector<64x64xf32> -> vector<64x64xf32>
    %98 = arith.addf %97, %3 : vector<64x64xf32>
    %cst_49 = arith.constant dense<0xFF800000> : vector<64xf32>
    %99 = vector.multi_reduction <maximumf>, %98, %cst_49 [1] : vector<64x64xf32> to vector<64xf32>
    %100 = vector.shape_cast %99 : vector<64xf32> to vector<64x1xf32>
    %101 = vector.broadcast %100 : vector<64x1xf32> to vector<64x64xf32>
    %102 = arith.subf %98, %101 : vector<64x64xf32>
    %103 = math.exp %102 : vector<64x64xf32>
    %cst_50 = arith.constant dense<0.000000e+00> : vector<64xf32>
    %104 = vector.multi_reduction <add>, %103, %cst_50 [1] : vector<64x64xf32> to vector<64xf32>
    %105 = vector.shape_cast %104 : vector<64xf32> to vector<64x1xf32>
    %106 = tpu.reciprocal %105 {approx = true} : vector<64x1xf32> -> vector<64x1xf32>
    %107 = vector.broadcast %106 : vector<64x1xf32> to vector<64x64xf32>
    %108 = arith.mulf %103, %107 : vector<64x64xf32>
    %109 = arith.truncf %108 : vector<64x64xf32> to vector<64x64xbf16>
    %cst_51 = arith.constant dense<0.000000e+00> : vector<64x32xf32>
    %110 = tpu.matmul %109, %96, %cst_51 {dimension_numbers = #tpu.dot_dimension_numbers<[1], [0], [0], [1], [0, 0, 1, 1], [], []>} : vector<64x64xbf16>, vector<64x32xbf16>, vector<64x32xf32> -> vector<64x32xf32>
    %c0_52 = arith.constant 0 : index
    %c0_53 = arith.constant 0 : index
    %c96 = arith.constant 96 : index
    %111 = vector.load %arg7[%c0_52, %c0_53, %c96] : memref<1x64x128xf32, #tpu.memory_space<vmem>>, vector<1x64x32xf32>
    %112 = vector.shape_cast %111 : vector<1x64x32xf32> to vector<64x32xf32>
    %113 = vector.shape_cast %110 : vector<64x32xf32> to vector<1x64x32xf32>
    tpu.vector_store %arg7[%c0_52, %c0_53, %c96], %113 {strides = array<i32>} : memref<1x64x128xf32, #tpu.memory_space<vmem>>, vector<1x64x32xf32>,
    return
  }
  func.func @transform_0(%arg0: i32) -> (i32, i32, i32) {
    %c0_i32 = arith.constant 0 : i32
    %c0_i32_0 = arith.constant 0 : i32
    %c0_i32_1 = arith.constant 0 : i32
    return %arg0, %c0_i32, %c0_i32_0 : i32, i32, i32
  }
  func.func @transform_1(%arg0: i32) -> (i32, i32, i32) {
    %c0_i32 = arith.constant 0 : i32
    %c0_i32_0 = arith.constant 0 : i32
    %c0_i32_1 = arith.constant 0 : i32
    return %arg0, %c0_i32, %c0_i32_0 : i32, i32, i32
  }
  func.func @transform_2(%arg0: i32) -> (i32, i32, i32) {
    %c0_i32 = arith.constant 0 : i32
    %c0_i32_0 = arith.constant 0 : i32
    %c0_i32_1 = arith.constant 0 : i32
    return %arg0, %c0_i32, %c0_i32_0 : i32, i32, i32
  }
  func.func @transform_3(%arg0: i32) -> (i32, i32, i32) {
    %c0_i32 = arith.constant 0 : i32
    %c0_i32_0 = arith.constant 0 : i32
    %c0_i32_1 = arith.constant 0 : i32
    %c0_i32_2 = arith.constant 0 : i32
    return %c0_i32, %c0_i32_0, %c0_i32_1 : i32, i32, i32
  }
  func.func @transform_4(%arg0: i32) -> (i32, i32, i32) {
    %c0_i32 = arith.constant 0 : i32
    %c0_i32_0 = arith.constant 0 : i32
    %c0_i32_1 = arith.constant 0 : i32
    %c0_i32_2 = arith.constant 0 : i32
    return %c0_i32, %c0_i32_0, %c0_i32_1 : i32, i32, i32
  }
  func.func @transform_5(%arg0: i32) -> (i32, i32) {
    %c0_i32 = arith.constant 0 : i32
    %c0_i32_0 = arith.constant 0 : i32
    %c0_i32_1 = arith.constant 0 : i32
    return %c0_i32, %c0_i32_0 : i32, i32
  }
  func.func @transform_6(%arg0: i32) -> (i32, i32, i32) {
    %c0_i32 = arith.constant 0 : i32
    %c0_i32_0 = arith.constant 0 : i32
    %c0_i32_1 = arith.constant 0 : i32
    return %arg0, %c0_i32, %c0_i32_0 : i32, i32, i32
  }
}

</mosaic_0001>

<llo_original>
// kernel: mha_forward.1
$region0: #{mha_forward.1}
  #allocation0 [shape = 'u32[]', space=smem, size = 0x4, offset = 0x4, fixed_abs, tag = 'smem constant byte address 0x4 - core index']
  #allocation1 [shape = 'u32[72,128]{1,0:T(1,128)}', space=vmem, size = 0x9000, scoped, tag = 'internal scratch']
  %s0 = inlined_call_operand.vmem [shape: bf16[2,64,128], index: 0, kind: input, shape index: {}]
  %s1 = inlined_call_operand.vmem [shape: bf16[2,64,128], index: 1, kind: input, shape index: {}]
  %s2 = inlined_call_operand.vmem [shape: bf16[2,64,128], index: 2, kind: input, shape index: {}]
  %s3 = inlined_call_operand.vmem [shape: bf16[3,128,128], index: 3, kind: input, shape index: {}]
  %s4 = inlined_call_operand.vmem [shape: f32[3,1,128], index: 4, kind: input, shape index: {}]
  %s5 = inlined_call_operand.vmem [shape: s8[64,64], index: 5, kind: input, shape index: {}]
  %s6 = inlined_call_operand.hbm [shape: f32[2,64,128], index: 6, kind: output, shape index: {}]
  %s7 = sld [smem:[#allocation0]]
  $region57: #{mha_forward.1} parent=0
    _
  %s9 = ssub.s32 1, %s7
  %s10 = scalar_select 0, %s9, %s7
  $region1: #{mha_forward.1} parent=0
    #allocation2 [shape = 'u8[65536]{0}', space=vmem, size = 0x10000, scoped, tag = 'output window, operand 0']
    #allocation3 [shape = 's32[2]{0}', space=sflag, size = 0x8, scoped, tag = 'scoped memory for mha_forward.1']
    %11 = vsyncpa [#allocation3], 0
    %s12 = scalar_lea.sflag [#allocation3], 1
    %13 = vsyncpa %s12, 0
    loop: start=0, step=1, limit=4
    $region2: #{mha_forward.1} parent=1 // loop_pre_header
      _
    $region3: #{mha_forward.1} parent=1 // loop_header
      %s15 = sphi 0, %s19
      %p16 = scmp.ge.s32.totalorder %s15, 4
      %s25 = sphi 0, %s27
      %s28 = sphi 0, %s25
      %s29 = sphi 0, %s28
      %s45 = sphi 0, %s29
      %s51 = sphi 0, %s53
      %s54 = sphi 0, %s51
      %s55 = sphi 0, %s54
      %s71 = sphi 0, %s55
      %s77 = sphi 0, %s79
      %s80 = sphi 0, %s77
      %s81 = sphi 0, %s80
      %s97 = sphi 0, %s81
      %s101 = sphi 0, %s101
      %s103 = sphi 0, %s101
      %s104 = sphi 0, %s103
      %s118 = sphi 0, %s104
      %s122 = sphi 0, %s122
      %s124 = sphi 0, %s122
      %s125 = sphi 0, %s124
      %s139 = sphi 0, %s125
      %s143 = sphi 0, %s143
      %s145 = sphi 0, %s143
      %s146 = sphi 0, %s145
      %s160 = sphi 0, %s146
      %s166 = sphi 0, %s168
      %s169 = sphi 0, %s166
      %s170 = sphi 0, %s169
      %s186 = sphi 0, %s170
    $region4: #{mha_forward.1} parent=1 // loop_header_branch
      %18 = sbr.rel (%p16) target = $region8
    $region5: #{mha_forward.1} parent=1 // loop_body
      %s20 = ssub.s32 %s15, 1
      %s21 = ssub.s32 %s15, 2
      %s22 = sadd.s32 %s15, 1
      %s23 = ssub.s32 %s15, %s22
      %p24 = scmp.eq.s32.totalorder %s23, 0
      %s26 = sadd.s32 %s25, 1
      %s27 = scalar_select %p24, %s25, %s26
      %p30 = pneg %p24
      %p31 = scmp.eq.s32.totalorder %s15, 1
      %p32 = por %p30, %p31
      %p33 = scmp.ne.s32.totalorder %s25, %s28
      %p34 = scmp.eq.s32.totalorder %s15, 0
      %p35 = por %p33, %p34
      %p36 = scmp.ne.s32.totalorder %s25, %s28
      %p37 = scmp.eq.s32.totalorder %s20, 1
      %p38 = por %p36, %p37
      %p39 = scmp.ne.s32.totalorder %s28, %s29
      %p40 = scmp.eq.s32.totalorder %s20, 0
      %p41 = por %p39, %p40
      %p42 = scmp.ne.s32.totalorder %s28, %s29
      %p43 = scmp.eq.s32.totalorder %s21, 1
      %p44 = por %p42, %p43
      %p46 = scmp.ne.s32.totalorder %s29, %s45
      %p47 = scmp.eq.s32.totalorder %s21, 0
      %p48 = por %p46, %p47
      %s49 = ssub.s32 %s15, %s22
      %p50 = scmp.eq.s32.totalorder %s49, 0
      %s52 = sadd.s32 %s51, 1
      %s53 = scalar_select %p50, %s51, %s52
      %p56 = pneg %p50
      %p57 = scmp.eq.s32.totalorder %s15, 1
      %p58 = por %p56, %p57
      %p59 = scmp.ne.s32.totalorder %s51, %s54
      %p60 = scmp.eq.s32.totalorder %s15, 0
      %p61 = por %p59, %p60
      %p62 = scmp.ne.s32.totalorder %s51, %s54
      %p63 = scmp.eq.s32.totalorder %s20, 1
      %p64 = por %p62, %p63
      %p65 = scmp.ne.s32.totalorder %s54, %s55
      %p66 = scmp.eq.s32.totalorder %s20, 0
      %p67 = por %p65, %p66
      %p68 = scmp.ne.s32.totalorder %s54, %s55
      %p69 = scmp.eq.s32.totalorder %s21, 1
      %p70 = por %p68, %p69
      %p72 = scmp.ne.s32.totalorder %s55, %s71
      %p73 = scmp.eq.s32.totalorder %s21, 0
      %p74 = por %p72, %p73
      %s75 = ssub.s32 %s15, %s22
      %p76 = scmp.eq.s32.totalorder %s75, 0
      %s78 = sadd.s32 %s77, 1
      %s79 = scalar_select %p76, %s77, %s78
      %p82 = pneg %p76
      %p83 = scmp.eq.s32.totalorder %s15, 1
      %p84 = por %p82, %p83
      %p85 = scmp.ne.s32.totalorder %s77, %s80
      %p86 = scmp.eq.s32.totalorder %s15, 0
      %p87 = por %p85, %p86
      %p88 = scmp.ne.s32.totalorder %s77, %s80
      %p89 = scmp.eq.s32.totalorder %s20, 1
      %p90 = por %p88, %p89
      %p91 = scmp.ne.s32.totalorder %s80, %s81
      %p92 = scmp.eq.s32.totalorder %s20, 0
      %p93 = por %p91, %p92
      %p94 = scmp.ne.s32.totalorder %s80, %s81
      %p95 = scmp.eq.s32.totalorder %s21, 1
      %p96 = por %p94, %p95
      %p98 = scmp.ne.s32.totalorder %s81, %s97
      %p99 = scmp.eq.s32.totalorder %s21, 0
      %p100 = por %p98, %p99
      %s102 = sadd.s32 %s101, 1
      %p105 = scmp.eq.s32.totalorder %s15, 1
      %p106 = scmp.ne.s32.totalorder %s101, %s103
      %p107 = scmp.eq.s32.totalorder %s15, 0
      %p108 = por %p106, %p107
      %p109 = scmp.ne.s32.totalorder %s101, %s103
      %p110 = scmp.eq.s32.totalorder %s20, 1
      %p111 = por %p109, %p110
      %p112 = scmp.ne.s32.totalorder %s103, %s104
      %p113 = scmp.eq.s32.totalorder %s20, 0
      %p114 = por %p112, %p113
      %p115 = scmp.ne.s32.totalorder %s103, %s104
      %p116 = scmp.eq.s32.totalorder %s21, 1
      %p117 = por %p115, %p116
      %p119 = scmp.ne.s32.totalorder %s104, %s118
      %p120 = scmp.eq.s32.totalorder %s21, 0
      %p121 = por %p119, %p120
      %s123 = sadd.s32 %s122, 1
      %p126 = scmp.eq.s32.totalorder %s15, 1
      %p127 = scmp.ne.s32.totalorder %s122, %s124
      %p128 = scmp.eq.s32.totalorder %s15, 0
      %p129 = por %p127, %p128
      %p130 = scmp.ne.s32.totalorder %s122, %s124
      %p131 = scmp.eq.s32.totalorder %s20, 1
      %p132 = por %p130, %p131
      %p133 = scmp.ne.s32.totalorder %s124, %s125
      %p134 = scmp.eq.s32.totalorder %s20, 0
      %p135 = por %p133, %p134
      %p136 = scmp.ne.s32.totalorder %s124, %s125
      %p137 = scmp.eq.s32.totalorder %s21, 1
      %p138 = por %p136, %p137
      %p140 = scmp.ne.s32.totalorder %s125, %s139
      %p141 = scmp.eq.s32.totalorder %s21, 0
      %p142 = por %p140, %p141
      %s144 = sadd.s32 %s143, 1
      %p147 = scmp.eq.s32.totalorder %s15, 1
      %p148 = scmp.ne.s32.totalorder %s143, %s145
      %p149 = scmp.eq.s32.totalorder %s15, 0
      %p150 = por %p148, %p149
      %p151 = scmp.ne.s32.totalorder %s143, %s145
      %p152 = scmp.eq.s32.totalorder %s20, 1
      %p153 = por %p151, %p152
      %p154 = scmp.ne.s32.totalorder %s145, %s146
      %p155 = scmp.eq.s32.totalorder %s20, 0
      %p156 = por %p154, %p155
      %p157 = scmp.ne.s32.totalorder %s145, %s146
      %p158 = scmp.eq.s32.totalorder %s21, 1
      %p159 = por %p157, %p158
      %p161 = scmp.ne.s32.totalorder %s146, %s160
      %p162 = scmp.eq.s32.totalorder %s21, 0
      %p163 = por %p161, %p162
      %s164 = ssub.s32 %s15, %s22
      %p165 = scmp.eq.s32.totalorder %s164, 0
      %s167 = sadd.s32 %s166, 1
      %s168 = scalar_select %p165, %s166, %s167
      %p171 = pneg %p165
      %p172 = scmp.eq.s32.totalorder %s15, 1
      %p173 = por %p171, %p172
      %p174 = scmp.ne.s32.totalorder %s166, %s169
      %p175 = scmp.eq.s32.totalorder %s15, 0
      %p176 = por %p174, %p175
      %p177 = scmp.ne.s32.totalorder %s166, %s169
      %p178 = scmp.eq.s32.totalorder %s20, 1
      %p179 = por %p177, %p178
      %p180 = scmp.ne.s32.totalorder %s169, %s170
      %p181 = scmp.eq.s32.totalorder %s20, 0
      %p182 = por %p180, %p181
      %p183 = scmp.ne.s32.totalorder %s169, %s170
      %p184 = scmp.eq.s32.totalorder %s21, 1
      %p185 = por %p183, %p184
      %p187 = scmp.ne.s32.totalorder %s170, %s186
      %p188 = scmp.eq.s32.totalorder %s21, 0
      %p189 = por %p187, %p188
      %p190 = scmp.le.s32.totalorder 1, %s15
      %p191 = scmp.lt.s32.totalorder %s15, 3
      %p192 = pnand %p190, %p191
      %p193 = pneg %p192
      // Predicated region
      $region9: #{mha_forward.1} parent=5 // pred_check
        _
      $region10: #{mha_forward.1} parent=5 // pred_check_branch
        %195 = sbr.rel (%p192) target = $region12
      $region11: #{mha_forward.1} parent=5 // pred_region
        %s196 = ssub.s32 %s15, 1
        // Predicated region
        $region13: #{mha_forward.1} parent=11 // pred_check
          %p197 = pneg %p114
        $region14: #{mha_forward.1} parent=11 // pred_check_branch
          %199 = sbr.rel (%p197) target = $region16
        $region15: #{mha_forward.1} parent=11 // pred_region
          _
        $region16: #{mha_forward.1} parent=11 // pred_fallthru
          _
        // Predicated region
        $region17: #{mha_forward.1} parent=11 // pred_check
          %p200 = pneg %p135
        $region18: #{mha_forward.1} parent=11 // pred_check_branch
          %202 = sbr.rel (%p200) target = $region20
        $region19: #{mha_forward.1} parent=11 // pred_region
          _
        $region20: #{mha_forward.1} parent=11 // pred_fallthru
          _
        // Predicated region
        $region21: #{mha_forward.1} parent=11 // pred_check
          %p203 = pneg %p156
        $region22: #{mha_forward.1} parent=11 // pred_check_branch
          %205 = sbr.rel (%p203) target = $region24
        $region23: #{mha_forward.1} parent=11 // pred_region
          _
        $region24: #{mha_forward.1} parent=11 // pred_fallthru
          _
      $region12: #{mha_forward.1} parent=5 // pred_fallthru
        _
      %p206 = scmp.lt.s32.totalorder %s15, 2
      // Predicated region
      $region25: #{mha_forward.1} parent=5 // pred_check
        %p207 = pneg %p206
      $region26: #{mha_forward.1} parent=5 // pred_check_branch
        %209 = sbr.rel (%p207) target = $region28
      $region27: #{mha_forward.1} parent=5 // pred_region
        // Predicated region
        $region29: #{mha_forward.1} parent=27 // pred_check
          %p210 = pneg %p35
        $region30: #{mha_forward.1} parent=27 // pred_check_branch
          %212 = sbr.rel (%p210) target = $region32
        $region31: #{mha_forward.1} parent=27 // pred_region
          %p213 = scmp.lt.s32.totalorder %s15, 1
          %s214 = scalar_select %p213, %s15, 1
          %s215 = smul.addr %s214, 8
          %s216 = smul.addr %s215, 4
          %s217 = scalar_lea.vmem %s0, %s216
        $region32: #{mha_forward.1} parent=27 // pred_fallthru
          _
        // Predicated region
        $region33: #{mha_forward.1} parent=27 // pred_check
          %p218 = pneg %p61
        $region34: #{mha_forward.1} parent=27 // pred_check_branch
          %220 = sbr.rel (%p218) target = $region36
        $region35: #{mha_forward.1} parent=27 // pred_region
          %p221 = scmp.lt.s32.totalorder %s15, 1
          %s222 = scalar_select %p221, %s15, 1
          %s223 = smul.addr %s222, 8
          %s224 = smul.addr %s223, 4
          %s225 = scalar_lea.vmem %s1, %s224
        $region36: #{mha_forward.1} parent=27 // pred_fallthru
          _
        // Predicated region
        $region37: #{mha_forward.1} parent=27 // pred_check
          %p226 = pneg %p87
        $region38: #{mha_forward.1} parent=27 // pred_check_branch
          %228 = sbr.rel (%p226) target = $region40
        $region39: #{mha_forward.1} parent=27 // pred_region
          %p229 = scmp.lt.s32.totalorder %s15, 1
          %s230 = scalar_select %p229, %s15, 1
          %s231 = smul.addr %s230, 8
          %s232 = smul.addr %s231, 4
          %s233 = scalar_lea.vmem %s2, %s232
        $region40: #{mha_forward.1} parent=27 // pred_fallthru
          _
      $region28: #{mha_forward.1} parent=5 // pred_fallthru
        _
      %p234 = scmp.le.s32.totalorder 1, %s15
      %p235 = scmp.lt.s32.totalorder %s15, 3
      %p236 = pnand %p234, %p235
      %p237 = pneg %p236
      // Predicated region
      $region41: #{mha_forward.1} parent=5 // pred_check
        _
      $region42: #{mha_forward.1} parent=5 // pred_check_branch
        %239 = sbr.rel (%p236) target = $region44
      $region43: #{mha_forward.1} parent=5 // pred_region
        %s240 = ssub.s32 %s15, 1
        %p241 = scmp.lt.s32.totalorder %s20, 1
        %s242 = scalar_select %p241, %s20, 1
        %s243 = smul.addr %s242, 8
        %s244 = smul.addr %s243, 4
        %s245 = scalar_lea.vmem %s0, %s244
        %p246 = pneg %p41
        %p247 = pneg %p38
        %p248 = scmp.lt.s32.totalorder %s20, 1
        %s249 = scalar_select %p248, %s20, 1
        %s250 = smul.addr %s249, 8
        %s251 = smul.addr %s250, 4
        %s252 = scalar_lea.vmem %s1, %s251
        %p253 = pneg %p67
        %p254 = pneg %p64
        %p255 = scmp.lt.s32.totalorder %s20, 1
        %s256 = scalar_select %p255, %s20, 1
        %s257 = smul.addr %s256, 8
        %s258 = smul.addr %s257, 4
        %s259 = scalar_lea.vmem %s2, %s258
        %p260 = pneg %p93
        %p261 = pneg %p90
        %p262 = pneg %p114
        %p263 = pneg %p111
        %p264 = pneg %p135
        %p265 = pneg %p132
        %p266 = pneg %p156
        %p267 = pneg %p153
        %p268 = pneg %p182
        %p269 = pneg %p179
        %s270 = sand.u32 %s169, 1
        %s271 = scalar_lea.sflag [#allocation3], %s270
        %s272 = sand.u32 %s169, 1
        %s273 = smul.addr %s272, 64
        %s274 = scalar_lea.vmem [#allocation2], %s273
        %p275 = scmp.lt.s32.totalorder %s20, 1
        %s276 = scalar_select %p275, %s20, 1
        %s277 = smul.addr %s276, 8
        %s278 = smul.addr %s277, 4
        %s279 = scalar_lea.vmem %s0, %s278
        %p280 = scmp.lt.s32.totalorder %s20, 1
        %s281 = scalar_select %p280, %s20, 1
        %s282 = smul.addr %s281, 8
        %s283 = smul.addr %s282, 4
        %s284 = scalar_lea.vmem %s1, %s283
        %p285 = scmp.lt.s32.totalorder %s20, 1
        %s286 = scalar_select %p285, %s20, 1
        %s287 = smul.addr %s286, 8
        %s288 = smul.addr %s287, 4
        %s289 = scalar_lea.vmem %s2, %s288
        %v291 = vld [vmem:[%s5] sm:$0xff]
        %v292 = vld [vmem:[%s5 + $0x8] sm:$0xff]
        %v293 = vunpack.c.0.s8 %v291
        %v294 = vunpack.c.1.s8 %v291
        %v295 = vunpack.c.2.s8 %v291
        %v296 = vunpack.c.3.s8 %v291
        %v297 = vunpack.c.0.s8 %v292
        %v298 = vunpack.c.1.s8 %v292
        %v299 = vunpack.c.2.s8 %v292
        %v300 = vunpack.c.3.s8 %v292
        %v301 = vcvt.s32.f32 %v293
        %v302 = vcvt.s32.f32 %v294
        %v303 = vcvt.s32.f32 %v295
        %v304 = vcvt.s32.f32 %v296
        %v305 = vcvt.s32.f32 %v297
        %v306 = vcvt.s32.f32 %v298
        %v307 = vcvt.s32.f32 %v299
        %v308 = vcvt.s32.f32 %v300
        %v309 = vmul.f32 %v301, -1e+30
        %v310 = vmul.f32 %v302, -1e+30
        %v311 = vmul.f32 %v303, -1e+30
        %v312 = vmul.f32 %v304, -1e+30
        %v313 = vmul.f32 %v305, -1e+30
        %v314 = vmul.f32 %v306, -1e+30
        %v315 = vmul.f32 %v307, -1e+30
        %v316 = vmul.f32 %v308, -1e+30
        %v317 = vld [vmem:[%s279] sm:$0xf]
        %v318 = vld [vmem:[%s279 + $0x4] sm:$0xf]
        %v319 = vld [vmem:[%s279 + $0x8] sm:$0xf]
        %v320 = vld [vmem:[%s279 + $0xc] sm:$0xf]
        %v321 = vld [vmem:[%s279 + $0x10] sm:$0xf]
        %v322 = vld [vmem:[%s279 + $0x14] sm:$0xf]
        %v323 = vld [vmem:[%s279 + $0x18] sm:$0xf]
        %v324 = vld [vmem:[%s279 + $0x1c] sm:$0xf]
        %v325 = vld [vmem:[%s3] sm:$0xf]
        %v326 = vld [vmem:[%s3 + $0x4] sm:$0xf]
        %v327 = vld [vmem:[%s3 + $0x8] sm:$0xf]
        %v328 = vld [vmem:[%s3 + $0xc] sm:$0xf]
        %v329 = vld [vmem:[%s3 + $0x10] sm:$0xf]
        %v330 = vld [vmem:[%s3 + $0x14] sm:$0xf]
        %v331 = vld [vmem:[%s3 + $0x18] sm:$0xf]
        %v332 = vld [vmem:[%s3 + $0x1c] sm:$0xf]
        %v333 = vld [vmem:[%s3 + $0x20] sm:$0xf]
        %v334 = vld [vmem:[%s3 + $0x24] sm:$0xf]
        %v335 = vld [vmem:[%s3 + $0x28] sm:$0xf]
        %v336 = vld [vmem:[%s3 + $0x2c] sm:$0xf]
        %v337 = vld [vmem:[%s3 + $0x30] sm:$0xf]
        %v338 = vld [vmem:[%s3 + $0x34] sm:$0xf]
        %v339 = vld [vmem:[%s3 + $0x38] sm:$0xf]
        %v340 = vld [vmem:[%s3 + $0x3c] sm:$0xf]
        %v341 = vld [vmem:[%s4] sm:$0x1]
        %v343 = vperm.slane %v341, 0
        %v353 = vunpack.c.l.b16 %v317
        %v354 = vunpack.c.l.b16 %v318
        %v355 = vunpack.c.l.b16 %v319
        %v356 = vunpack.c.l.b16 %v320
        %v357 = vunpack.c.l.b16 %v321
        %v358 = vunpack.c.l.b16 %v322
        %v359 = vunpack.c.l.b16 %v323
        %v360 = vunpack.c.l.b16 %v324
        %v361 = vpack.c.b16 %v354, %v353
        %v362 = vpack.c.b16 %v356, %v355
        %v363 = vpack.c.b16 %v358, %v357
        %v364 = vpack.c.b16 %v360, %v359
        %v385 = vunpack.c.l.b16 %v325
        %v386 = vunpack.c.l.b16 %v326
        %v387 = vunpack.c.l.b16 %v327
        %v388 = vunpack.c.l.b16 %v328
        %v389 = vunpack.c.l.b16 %v329
        %v390 = vunpack.c.l.b16 %v330
        %v391 = vunpack.c.l.b16 %v331
        %v392 = vunpack.c.l.b16 %v332
        %v393 = vunpack.c.l.b16 %v333
        %v394 = vunpack.c.l.b16 %v334
        %v395 = vunpack.c.l.b16 %v335
        %v396 = vunpack.c.l.b16 %v336
        %v397 = vunpack.c.l.b16 %v337
        %v398 = vunpack.c.l.b16 %v338
        %v399 = vunpack.c.l.b16 %v339
        %v400 = vunpack.c.l.b16 %v340
        %v401 = vpack.c.b16 %v386, %v385
        %v402 = vpack.c.b16 %v388, %v387
        %v403 = vpack.c.b16 %v390, %v389
        %v404 = vpack.c.b16 %v392, %v391
        %v405 = vpack.c.b16 %v394, %v393
        %v406 = vpack.c.b16 %v396, %v395
        %v407 = vpack.c.b16 %v398, %v397
        %v408 = vpack.c.b16 %v400, %v399
        %417 = vmatpush.bf16.msra.mxu0 %v408
        %418 = vmatpush.bf16.msra.mxu0 %v407
        %419 = vmatpush.bf16.msra.mxu0 %v406
        %420 = vmatpush.bf16.msra.mxu0 %v405
        %421 = vmatpush.bf16.msra.mxu0 %v404
        %422 = vmatpush.bf16.msra.mxu0 %v403
        %423 = vmatpush.bf16.msra.mxu0 %v402
        %424 = vmatpush.bf16.msra.mxu0 %v401
        %425 = vmatmul.bf16.gmra.mxu0 %v361
        %v426 = vpop.f32.mrf.mxu0
        %v427 = vadd.f32 %v343, %v426
        %v428 = vpop.f32.mrf.mxu0
        %v429 = vadd.f32 %v343, %v428
        %430 = vmatmul.bf16.gmra.mxu0 %v362
        %v431 = vpop.f32.mrf.mxu0
        %v432 = vadd.f32 %v343, %v431
        %v433 = vpop.f32.mrf.mxu0
        %v434 = vadd.f32 %v343, %v433
        %435 = vmatmul.bf16.gmra.mxu0 %v363
        %v436 = vpop.f32.mrf.mxu0
        %v437 = vadd.f32 %v343, %v436
        %v438 = vpop.f32.mrf.mxu0
        %v439 = vadd.f32 %v343, %v438
        %440 = vmatmul.bf16.gmra.mxu0 %v364
        %v441 = vpop.f32.mrf.mxu0
        %v442 = vadd.f32 %v343, %v441
        %v443 = vpop.f32.mrf.mxu0
        %v444 = vadd.f32 %v343, %v443
        %445 = vdwg.mxu0
        %v446 = vpack.c.bf16 %v427, %v427
        %v447 = vpack.c.bf16 %v429, %v429
        %v448 = vpack.c.bf16 %v432, %v432
        %v449 = vpack.c.bf16 %v434, %v434
        %v450 = vpack.c.bf16 %v437, %v437
        %v451 = vpack.c.bf16 %v439, %v439
        %v452 = vpack.c.bf16 %v442, %v442
        %v453 = vpack.c.bf16 %v444, %v444
        %v454 = vld [vmem:[%s284] sm:$0xf]
        %v455 = vld [vmem:[%s284 + $0x4] sm:$0xf]
        %v456 = vld [vmem:[%s284 + $0x8] sm:$0xf]
        %v457 = vld [vmem:[%s284 + $0xc] sm:$0xf]
        %v458 = vld [vmem:[%s284 + $0x10] sm:$0xf]
        %v459 = vld [vmem:[%s284 + $0x14] sm:$0xf]
        %v460 = vld [vmem:[%s284 + $0x18] sm:$0xf]
        %v461 = vld [vmem:[%s284 + $0x1c] sm:$0xf]
        %s462 = scalar_lea.vmem %s3, 64
        %v463 = vld [vmem:[%s462] sm:$0xf]
        %v464 = vld [vmem:[%s462 + $0x4] sm:$0xf]
        %v465 = vld [vmem:[%s462 + $0x8] sm:$0xf]
        %v466 = vld [vmem:[%s462 + $0xc] sm:$0xf]
        %v467 = vld [vmem:[%s462 + $0x10] sm:$0xf]
        %v468 = vld [vmem:[%s462 + $0x14] sm:$0xf]
        %v469 = vld [vmem:[%s462 + $0x18] sm:$0xf]
        %v470 = vld [vmem:[%s462 + $0x1c] sm:$0xf]
        %v471 = vld [vmem:[%s462 + $0x20] sm:$0xf]
        %v472 = vld [vmem:[%s462 + $0x24] sm:$0xf]
        %v473 = vld [vmem:[%s462 + $0x28] sm:$0xf]
        %v474 = vld [vmem:[%s462 + $0x2c] sm:$0xf]
        %v475 = vld [vmem:[%s462 + $0x30] sm:$0xf]
        %v476 = vld [vmem:[%s462 + $0x34] sm:$0xf]
        %v477 = vld [vmem:[%s462 + $0x38] sm:$0xf]
        %v478 = vld [vmem:[%s462 + $0x3c] sm:$0xf]
        %s479 = scalar_lea.vmem %s4, 1
        %v480 = vld [vmem:[%s479] sm:$0x1]
        %v482 = vperm.slane %v480, 0
        %v492 = vunpack.c.l.b16 %v454
        %v493 = vunpack.c.l.b16 %v455
        %v494 = vunpack.c.l.b16 %v456
        %v495 = vunpack.c.l.b16 %v457
        %v496 = vunpack.c.l.b16 %v458
        %v497 = vunpack.c.l.b16 %v459
        %v498 = vunpack.c.l.b16 %v460
        %v499 = vunpack.c.l.b16 %v461
        %v500 = vpack.c.b16 %v493, %v492
        %v501 = vpack.c.b16 %v495, %v494
        %v502 = vpack.c.b16 %v497, %v496
        %v503 = vpack.c.b16 %v499, %v498
        %v524 = vunpack.c.l.b16 %v463
        %v525 = vunpack.c.l.b16 %v464
        %v526 = vunpack.c.l.b16 %v465
        %v527 = vunpack.c.l.b16 %v466
        %v528 = vunpack.c.l.b16 %v467
        %v529 = vunpack.c.l.b16 %v468
        %v530 = vunpack.c.l.b16 %v469
        %v531 = vunpack.c.l.b16 %v470
        %v532 = vunpack.c.l.b16 %v471
        %v533 = vunpack.c.l.b16 %v472
        %v534 = vunpack.c.l.b16 %v473
        %v535 = vunpack.c.l.b16 %v474
        %v536 = vunpack.c.l.b16 %v475
        %v537 = vunpack.c.l.b16 %v476
        %v538 = vunpack.c.l.b16 %v477
        %v539 = vunpack.c.l.b16 %v478
        %v540 = vpack.c.b16 %v525, %v524
        %v541 = vpack.c.b16 %v527, %v526
        %v542 = vpack.c.b16 %v529, %v528
        %v543 = vpack.c.b16 %v531, %v530
        %v544 = vpack.c.b16 %v533, %v532
        %v545 = vpack.c.b16 %v535, %v534
        %v546 = vpack.c.b16 %v537, %v536
        %v547 = vpack.c.b16 %v539, %v538
        %556 = vmatpush.bf16.msra.mxu0 %v547
        %557 = vmatpush.bf16.msra.mxu0 %v546
        %558 = vmatpush.bf16.msra.mxu0 %v545
        %559 = vmatpush.bf16.msra.mxu0 %v544
        %560 = vmatpush.bf16.msra.mxu0 %v543
        %561 = vmatpush.bf16.msra.mxu0 %v542
        %562 = vmatpush.bf16.msra.mxu0 %v541
        %563 = vmatpush.bf16.msra.mxu0 %v540
        %564 = vmatmul.bf16.gmra.mxu0 %v500
        %v565 = vpop.f32.mrf.mxu0
        %v566 = vadd.f32 %v482, %v565
        %v567 = vpop.f32.mrf.mxu0
        %v568 = vadd.f32 %v482, %v567
        %569 = vmatmul.bf16.gmra.mxu0 %v501
        %v570 = vpop.f32.mrf.mxu0
        %v571 = vadd.f32 %v482, %v570
        %v572 = vpop.f32.mrf.mxu0
        %v573 = vadd.f32 %v482, %v572
        %574 = vmatmul.bf16.gmra.mxu0 %v502
        %v575 = vpop.f32.mrf.mxu0
        %v576 = vadd.f32 %v482, %v575
        %v577 = vpop.f32.mrf.mxu0
        %v578 = vadd.f32 %v482, %v577
        %579 = vmatmul.bf16.gmra.mxu0 %v503
        %v580 = vpop.f32.mrf.mxu0
        %v581 = vadd.f32 %v482, %v580
        %v582 = vpop.f32.mrf.mxu0
        %v583 = vadd.f32 %v482, %v582
        %584 = vdwg.mxu0
        %v585 = vpack.c.bf16 %v566, %v566
        %v586 = vpack.c.bf16 %v568, %v568
        %v587 = vpack.c.bf16 %v571, %v571
        %v588 = vpack.c.bf16 %v573, %v573
        %v589 = vpack.c.bf16 %v576, %v576
        %v590 = vpack.c.bf16 %v578, %v578
        %v591 = vpack.c.bf16 %v581, %v581
        %v592 = vpack.c.bf16 %v583, %v583
        %v593 = vld [vmem:[%s289] sm:$0xf]
        %v594 = vld [vmem:[%s289 + $0x4] sm:$0xf]
        %v595 = vld [vmem:[%s289 + $0x8] sm:$0xf]
        %v596 = vld [vmem:[%s289 + $0xc] sm:$0xf]
        %v597 = vld [vmem:[%s289 + $0x10] sm:$0xf]
        %v598 = vld [vmem:[%s289 + $0x14] sm:$0xf]
        %v599 = vld [vmem:[%s289 + $0x18] sm:$0xf]
        %v600 = vld [vmem:[%s289 + $0x1c] sm:$0xf]
        %s601 = scalar_lea.vmem %s3, 128
        %v602 = vld [vmem:[%s601] sm:$0xf]
        %v603 = vld [vmem:[%s601 + $0x4] sm:$0xf]
        %v604 = vld [vmem:[%s601 + $0x8] sm:$0xf]
        %v605 = vld [vmem:[%s601 + $0xc] sm:$0xf]
        %v606 = vld [vmem:[%s601 + $0x10] sm:$0xf]
        %v607 = vld [vmem:[%s601 + $0x14] sm:$0xf]
        %v608 = vld [vmem:[%s601 + $0x18] sm:$0xf]
        %v609 = vld [vmem:[%s601 + $0x1c] sm:$0xf]
        %v610 = vld [vmem:[%s601 + $0x20] sm:$0xf]
        %v611 = vld [vmem:[%s601 + $0x24] sm:$0xf]
        %v612 = vld [vmem:[%s601 + $0x28] sm:$0xf]
        %v613 = vld [vmem:[%s601 + $0x2c] sm:$0xf]
        %v614 = vld [vmem:[%s601 + $0x30] sm:$0xf]
        %v615 = vld [vmem:[%s601 + $0x34] sm:$0xf]
        %v616 = vld [vmem:[%s601 + $0x38] sm:$0xf]
        %v617 = vld [vmem:[%s601 + $0x3c] sm:$0xf]
        %s618 = scalar_lea.vmem %s4, 2
        %v619 = vld [vmem:[%s618] sm:$0x1]
        %v621 = vperm.slane %v619, 0
        %v631 = vunpack.c.l.b16 %v593
        %v632 = vunpack.c.l.b16 %v594
        %v633 = vunpack.c.l.b16 %v595
        %v634 = vunpack.c.l.b16 %v596
        %v635 = vunpack.c.l.b16 %v597
        %v636 = vunpack.c.l.b16 %v598
        %v637 = vunpack.c.l.b16 %v599
        %v638 = vunpack.c.l.b16 %v600
        %v639 = vpack.c.b16 %v632, %v631
        %v640 = vpack.c.b16 %v634, %v633
        %v641 = vpack.c.b16 %v636, %v635
        %v642 = vpack.c.b16 %v638, %v637
        %v663 = vunpack.c.l.b16 %v602
        %v664 = vunpack.c.l.b16 %v603
        %v665 = vunpack.c.l.b16 %v604
        %v666 = vunpack.c.l.b16 %v605
        %v667 = vunpack.c.l.b16 %v606
        %v668 = vunpack.c.l.b16 %v607
        %v669 = vunpack.c.l.b16 %v608
        %v670 = vunpack.c.l.b16 %v609
        %v671 = vunpack.c.l.b16 %v610
        %v672 = vunpack.c.l.b16 %v611
        %v673 = vunpack.c.l.b16 %v612
        %v674 = vunpack.c.l.b16 %v613
        %v675 = vunpack.c.l.b16 %v614
        %v676 = vunpack.c.l.b16 %v615
        %v677 = vunpack.c.l.b16 %v616
        %v678 = vunpack.c.l.b16 %v617
        %v679 = vpack.c.b16 %v664, %v663
        %v680 = vpack.c.b16 %v666, %v665
        %v681 = vpack.c.b16 %v668, %v667
        %v682 = vpack.c.b16 %v670, %v669
        %v683 = vpack.c.b16 %v672, %v671
        %v684 = vpack.c.b16 %v674, %v673
        %v685 = vpack.c.b16 %v676, %v675
        %v686 = vpack.c.b16 %v678, %v677
        %695 = vmatpush.bf16.msra.mxu0 %v686
        %696 = vmatpush.bf16.msra.mxu0 %v685
        %697 = vmatpush.bf16.msra.mxu0 %v684
        %698 = vmatpush.bf16.msra.mxu0 %v683
        %699 = vmatpush.bf16.msra.mxu0 %v682
        %700 = vmatpush.bf16.msra.mxu0 %v681
        %701 = vmatpush.bf16.msra.mxu0 %v680
        %702 = vmatpush.bf16.msra.mxu0 %v679
        %703 = vmatmul.bf16.gmra.mxu0 %v639
        %v704 = vpop.f32.mrf.mxu0
        %v705 = vadd.f32 %v621, %v704
        %v706 = vpop.f32.mrf.mxu0
        %v707 = vadd.f32 %v621, %v706
        %708 = vmatmul.bf16.gmra.mxu0 %v640
        %v709 = vpop.f32.mrf.mxu0
        %v710 = vadd.f32 %v621, %v709
        %v711 = vpop.f32.mrf.mxu0
        %v712 = vadd.f32 %v621, %v711
        %713 = vmatmul.bf16.gmra.mxu0 %v641
        %v714 = vpop.f32.mrf.mxu0
        %v715 = vadd.f32 %v621, %v714
        %v716 = vpop.f32.mrf.mxu0
        %v717 = vadd.f32 %v621, %v716
        %718 = vmatmul.bf16.gmra.mxu0 %v642
        %v719 = vpop.f32.mrf.mxu0
        %v720 = vadd.f32 %v621, %v719
        %v721 = vpop.f32.mrf.mxu0
        %v722 = vadd.f32 %v621, %v721
        %723 = vdwg.mxu0
        %v724 = vpack.c.bf16 %v705, %v705
        %v725 = vpack.c.bf16 %v707, %v707
        %v726 = vpack.c.bf16 %v710, %v710
        %v727 = vpack.c.bf16 %v712, %v712
        %v728 = vpack.c.bf16 %v715, %v715
        %v729 = vpack.c.bf16 %v717, %v717
        %v730 = vpack.c.bf16 %v720, %v720
        %v731 = vpack.c.bf16 %v722, %v722
        %v740 = vunpack.c.l.b16 %v446
        %v741 = vunpack.c.l.b16 %v447
        %v742 = vunpack.c.l.b16 %v448
        %v743 = vunpack.c.l.b16 %v449
        %v744 = vunpack.c.l.b16 %v450
        %v745 = vunpack.c.l.b16 %v451
        %v746 = vunpack.c.l.b16 %v452
        %v747 = vunpack.c.l.b16 %v453
        %v748 = vpack.c.b16 %v741, %v740
        %v749 = vpack.c.b16 %v743, %v742
        %v750 = vpack.c.b16 %v745, %v744
        %v751 = vpack.c.b16 %v747, %v746
        %v760 = vunpack.c.l.b16 %v585
        %v761 = vunpack.c.l.b16 %v586
        %v762 = vunpack.c.l.b16 %v587
        %v763 = vunpack.c.l.b16 %v588
        %v764 = vunpack.c.l.b16 %v589
        %v765 = vunpack.c.l.b16 %v590
        %v766 = vunpack.c.l.b16 %v591
        %v767 = vunpack.c.l.b16 %v592
        %v768 = vpack.c.b16 %v761, %v760
        %v769 = vpack.c.b16 %v763, %v762
        %v770 = vpack.c.b16 %v765, %v764
        %v771 = vpack.c.b16 %v767, %v766
        %vm772 = vcmask 261120
        %v774 = vsel %vm772, %v748, 0
        %v777 = vsel %vm772, %v749, 0
        %v780 = vsel %vm772, %v750, 0
        %v783 = vsel %vm772, %v751, 0
        %v786 = vsel %vm772, %v768, 0
        %v789 = vsel %vm772, %v769, 0
        %v792 = vsel %vm772, %v770, 0
        %v795 = vsel %vm772, %v771, 0
        %797 = vmatpush.bf16.xpose.msra.mxu0 0
        %798 = vmatpush.bf16.xpose.msra.mxu0 0
        %799 = vmatpush.bf16.xpose.msra.mxu0 0
        %800 = vmatpush.bf16.xpose.msra.mxu0 0
        %801 = vmatpush.bf16.xpose.msra.mxu0 %v795
        %802 = vmatpush.bf16.xpose.msra.mxu0 %v792
        %803 = vmatpush.bf16.xpose.msra.mxu0 %v789
        %804 = vmatpush.bf16.xpose.msra.mxu0 %v786
        %805 = vmatmul.bf16.gmra.mxu0 %v774
        %v806 = vpop.f32.mrf.mxu0
        %v807 = vadd.f32 %v309, %v806
        %v808 = vpop.f32.mrf.mxu0
        %v809 = vadd.f32 %v310, %v808
        %810 = vmatmul.bf16.gmra.mxu0 %v777
        %v811 = vpop.f32.mrf.mxu0
        %v812 = vadd.f32 %v311, %v811
        %v813 = vpop.f32.mrf.mxu0
        %v814 = vadd.f32 %v312, %v813
        %815 = vmatmul.bf16.gmra.mxu0 %v780
        %v816 = vpop.f32.mrf.mxu0
        %v817 = vadd.f32 %v313, %v816
        %v818 = vpop.f32.mrf.mxu0
        %v819 = vadd.f32 %v314, %v818
        %820 = vmatmul.bf16.gmra.mxu0 %v783
        %v821 = vpop.f32.mrf.mxu0
        %v822 = vadd.f32 %v315, %v821
        %v823 = vpop.f32.mrf.mxu0
        %v824 = vadd.f32 %v316, %v823
        %825 = vdwg.mxu0
        %vm826 = vcmask 523264
        %v827 = vsel %vm826, %v807, -inf
        %828 = vmax.xlane.f32.xlu0 %v827
        %v829 = vpop.xlane.xlu0 %828
        %v830 = vsel %vm826, %v809, -inf
        %831 = vmax.xlane.f32.xlu0 %v830
        %v832 = vpop.xlane.xlu0 %831
        %v833 = vsel %vm826, %v812, -inf
        %834 = vmax.xlane.f32.xlu0 %v833
        %v835 = vpop.xlane.xlu0 %834
        %v836 = vsel %vm826, %v814, -inf
        %837 = vmax.xlane.f32.xlu0 %v836
        %v838 = vpop.xlane.xlu0 %837
        %v839 = vsel %vm826, %v817, -inf
        %840 = vmax.xlane.f32.xlu0 %v839
        %v841 = vpop.xlane.xlu0 %840
        %v842 = vsel %vm826, %v819, -inf
        %843 = vmax.xlane.f32.xlu0 %v842
        %v844 = vpop.xlane.xlu0 %843
        %v845 = vsel %vm826, %v822, -inf
        %846 = vmax.xlane.f32.xlu0 %v845
        %v847 = vpop.xlane.xlu0 %846
        %v848 = vsel %vm826, %v824, -inf
        %849 = vmax.xlane.f32.xlu0 %v848
        %v850 = vpop.xlane.xlu0 %849
        %v851 = vsub.f32 %v807, %v829
        %v852 = vsub.f32 %v809, %v832
        %v853 = vsub.f32 %v812, %v835
        %v854 = vsub.f32 %v814, %v838
        %v855 = vsub.f32 %v817, %v841
        %v856 = vsub.f32 %v819, %v844
        %v857 = vsub.f32 %v822, %v847
        %v858 = vsub.f32 %v824, %v850
        %v859 = vmul.f32 %v851, 1.442695
        %v860 = vpow.pop %v859
        %v861 = vmul.f32 %v852, 1.442695
        %v862 = vpow.pop %v861
        %v863 = vmul.f32 %v853, 1.442695
        %v864 = vpow.pop %v863
        %v865 = vmul.f32 %v854, 1.442695
        %v866 = vpow.pop %v865
        %v867 = vmul.f32 %v855, 1.442695
        %v868 = vpow.pop %v867
        %v869 = vmul.f32 %v856, 1.442695
        %v870 = vpow.pop %v869
        %v871 = vmul.f32 %v857, 1.442695
        %v872 = vpow.pop %v871
        %v873 = vmul.f32 %v858, 1.442695
        %v874 = vpow.pop %v873
        %v875 = vsel %vm826, %v860, 0.0
        %876 = vadd.xlane.f32.xlu0 %v875
        %v877 = vpop.xlane.xlu0 %876
        %v878 = vsel %vm826, %v862, 0.0
        %879 = vadd.xlane.f32.xlu0 %v878
        %v880 = vpop.xlane.xlu0 %879
        %v881 = vsel %vm826, %v864, 0.0
        %882 = vadd.xlane.f32.xlu0 %v881
        %v883 = vpop.xlane.xlu0 %882
        %v884 = vsel %vm826, %v866, 0.0
        %885 = vadd.xlane.f32.xlu0 %v884
        %v886 = vpop.xlane.xlu0 %885
        %v887 = vsel %vm826, %v868, 0.0
        %888 = vadd.xlane.f32.xlu0 %v887
        %v889 = vpop.xlane.xlu0 %888
        %v890 = vsel %vm826, %v870, 0.0
        %891 = vadd.xlane.f32.xlu0 %v890
        %v892 = vpop.xlane.xlu0 %891
        %v893 = vsel %vm826, %v872, 0.0
        %894 = vadd.xlane.f32.xlu0 %v893
        %v895 = vpop.xlane.xlu0 %894
        %v896 = vsel %vm826, %v874, 0.0
        %897 = vadd.xlane.f32.xlu0 %v896
        %v898 = vpop.xlane.xlu0 %897
        %v899 = vrcp.pop %v877
        %v900 = vrcp.pop %v880
        %v901 = vrcp.pop %v883
        %v902 = vrcp.pop %v886
        %v903 = vrcp.pop %v889
        %v904 = vrcp.pop %v892
        %v905 = vrcp.pop %v895
        %v906 = vrcp.pop %v898
        %v907 = vmul.f32 %v860, %v899
        %v908 = vmul.f32 %v862, %v900
        %v909 = vmul.f32 %v864, %v901
        %v910 = vmul.f32 %v866, %v902
        %v911 = vmul.f32 %v868, %v903
        %v912 = vmul.f32 %v870, %v904
        %v913 = vmul.f32 %v872, %v905
        %v914 = vmul.f32 %v874, %v906
        %v915 = vpack.c.bf16 %v908, %v907
        %v916 = vpack.c.bf16 %v910, %v909
        %v917 = vpack.c.bf16 %v912, %v911
        %v918 = vpack.c.bf16 %v914, %v913
        %v927 = vunpack.c.l.b16 %v724
        %v928 = vunpack.c.l.b16 %v725
        %v929 = vunpack.c.l.b16 %v726
        %v930 = vunpack.c.l.b16 %v727
        %v931 = vunpack.c.l.b16 %v728
        %v932 = vunpack.c.l.b16 %v729
        %v933 = vunpack.c.l.b16 %v730
        %v934 = vunpack.c.l.b16 %v731
        %v935 = vpack.c.b16 %v928, %v927
        %v936 = vpack.c.b16 %v930, %v929
        %v937 = vpack.c.b16 %v932, %v931
        %v938 = vpack.c.b16 %v934, %v933
        %v944 = vsel %vm826, %v915, 0
        %v947 = vsel %vm826, %v916, 0
        %v950 = vsel %vm826, %v917, 0
        %v953 = vsel %vm826, %v918, 0
        %955 = vmatpush.bf16.msra.mxu0 0
        %956 = vmatpush.bf16.msra.mxu0 0
        %957 = vmatpush.bf16.msra.mxu0 0
        %958 = vmatpush.bf16.msra.mxu0 0
        %959 = vmatpush.bf16.msra.mxu0 %v938
        %960 = vmatpush.bf16.msra.mxu0 %v937
        %961 = vmatpush.bf16.msra.mxu0 %v936
        %962 = vmatpush.bf16.msra.mxu0 %v935
        %963 = vmatmul.bf16.gmra.mxu0 %v944
        %v964 = vpop.f32.mrf.mxu0
        %v965 = vadd.f32 0.0, %v964
        %v966 = vpop.f32.mrf.mxu0
        %v967 = vadd.f32 0.0, %v966
        %968 = vmatmul.bf16.gmra.mxu0 %v947
        %v969 = vpop.f32.mrf.mxu0
        %v970 = vadd.f32 0.0, %v969
        %v971 = vpop.f32.mrf.mxu0
        %v972 = vadd.f32 0.0, %v971
        %973 = vmatmul.bf16.gmra.mxu0 %v950
        %v974 = vpop.f32.mrf.mxu0
        %v975 = vadd.f32 0.0, %v974
        %v976 = vpop.f32.mrf.mxu0
        %v977 = vadd.f32 0.0, %v976
        %978 = vmatmul.bf16.gmra.mxu0 %v953
        %v979 = vpop.f32.mrf.mxu0
        %v980 = vadd.f32 0.0, %v979
        %v981 = vpop.f32.mrf.mxu0
        %v982 = vadd.f32 0.0, %v981
        %983 = vdwg.mxu0
        %984 = vst.msk [vmem:[%s274] sm:$0xff] %vm772, %v965
        %985 = vst.msk [vmem:[%s274 + $0x8] sm:$0xff] %vm772, %v967
        %986 = vst.msk [vmem:[%s274 + $0x10] sm:$0xff] %vm772, %v970
        %987 = vst.msk [vmem:[%s274 + $0x18] sm:$0xff] %vm772, %v972
        %988 = vst.msk [vmem:[%s274 + $0x20] sm:$0xff] %vm772, %v975
        %989 = vst.msk [vmem:[%s274 + $0x28] sm:$0xff] %vm772, %v977
        %990 = vst.msk [vmem:[%s274 + $0x30] sm:$0xff] %vm772, %v980
        %991 = vst.msk [vmem:[%s274 + $0x38] sm:$0xff] %vm772, %v982
        %992 = vrot.lane.b32.xlu0 %v748, 96
        %v993 = vpop.permute.xlu0 %992
        %994 = vrot.lane.b32.xlu0 %v749, 96
        %v995 = vpop.permute.xlu0 %994
        %996 = vrot.lane.b32.xlu0 %v750, 96
        %v997 = vpop.permute.xlu0 %996
        %998 = vrot.lane.b32.xlu0 %v751, 96
        %v999 = vpop.permute.xlu0 %998
        %1000 = vrot.lane.b32.xlu0 %v768, 96
        %v1001 = vpop.permute.xlu0 %1000
        %1002 = vrot.lane.b32.xlu0 %v769, 96
        %v1003 = vpop.permute.xlu0 %1002
        %1004 = vrot.lane.b32.xlu0 %v770, 96
        %v1005 = vpop.permute.xlu0 %1004
        %1006 = vrot.lane.b32.xlu0 %v771, 96
        %v1007 = vpop.permute.xlu0 %1006
        %v1009 = vsel %vm772, %v993, 0
        %v1012 = vsel %vm772, %v995, 0
        %v1015 = vsel %vm772, %v997, 0
        %v1018 = vsel %vm772, %v999, 0
        %v1021 = vsel %vm772, %v1001, 0
        %v1024 = vsel %vm772, %v1003, 0
        %v1027 = vsel %vm772, %v1005, 0
        %v1030 = vsel %vm772, %v1007, 0
        %1032 = vmatpush.bf16.xpose.msra.mxu0 0
        %1033 = vmatpush.bf16.xpose.msra.mxu0 0
        %1034 = vmatpush.bf16.xpose.msra.mxu0 0
        %1035 = vmatpush.bf16.xpose.msra.mxu0 0
        %1036 = vmatpush.bf16.xpose.msra.mxu0 %v1030
        %1037 = vmatpush.bf16.xpose.msra.mxu0 %v1027
        %1038 = vmatpush.bf16.xpose.msra.mxu0 %v1024
        %1039 = vmatpush.bf16.xpose.msra.mxu0 %v1021
        %1040 = vmatmul.bf16.gmra.mxu0 %v1009
        %v1041 = vpop.f32.mrf.mxu0
        %v1042 = vadd.f32 %v309, %v1041
        %v1043 = vpop.f32.mrf.mxu0
        %v1044 = vadd.f32 %v310, %v1043
        %1045 = vmatmul.bf16.gmra.mxu0 %v1012
        %v1046 = vpop.f32.mrf.mxu0
        %v1047 = vadd.f32 %v311, %v1046
        %v1048 = vpop.f32.mrf.mxu0
        %v1049 = vadd.f32 %v312, %v1048
        %1050 = vmatmul.bf16.gmra.mxu0 %v1015
        %v1051 = vpop.f32.mrf.mxu0
        %v1052 = vadd.f32 %v313, %v1051
        %v1053 = vpop.f32.mrf.mxu0
        %v1054 = vadd.f32 %v314, %v1053
        %1055 = vmatmul.bf16.gmra.mxu0 %v1018
        %v1056 = vpop.f32.mrf.mxu0
        %v1057 = vadd.f32 %v315, %v1056
        %v1058 = vpop.f32.mrf.mxu0
        %v1059 = vadd.f32 %v316, %v1058
        %1060 = vdwg.mxu0
        %v1061 = vsel %vm826, %v1042, -inf
        %1062 = vmax.xlane.f32.xlu0 %v1061
        %v1063 = vpop.xlane.xlu0 %1062
        %v1064 = vsel %vm826, %v1044, -inf
        %1065 = vmax.xlane.f32.xlu0 %v1064
        %v1066 = vpop.xlane.xlu0 %1065
        %v1067 = vsel %vm826, %v1047, -inf
        %1068 = vmax.xlane.f32.xlu0 %v1067
        %v1069 = vpop.xlane.xlu0 %1068
        %v1070 = vsel %vm826, %v1049, -inf
        %1071 = vmax.xlane.f32.xlu0 %v1070
        %v1072 = vpop.xlane.xlu0 %1071
        %v1073 = vsel %vm826, %v1052, -inf
        %1074 = vmax.xlane.f32.xlu0 %v1073
        %v1075 = vpop.xlane.xlu0 %1074
        %v1076 = vsel %vm826, %v1054, -inf
        %1077 = vmax.xlane.f32.xlu0 %v1076
        %v1078 = vpop.xlane.xlu0 %1077
        %v1079 = vsel %vm826, %v1057, -inf
        %1080 = vmax.xlane.f32.xlu0 %v1079
        %v1081 = vpop.xlane.xlu0 %1080
        %v1082 = vsel %vm826, %v1059, -inf
        %1083 = vmax.xlane.f32.xlu0 %v1082
        %v1084 = vpop.xlane.xlu0 %1083
        %v1085 = vsub.f32 %v1042, %v1063
        %v1086 = vsub.f32 %v1044, %v1066
        %v1087 = vsub.f32 %v1047, %v1069
        %v1088 = vsub.f32 %v1049, %v1072
        %v1089 = vsub.f32 %v1052, %v1075
        %v1090 = vsub.f32 %v1054, %v1078
        %v1091 = vsub.f32 %v1057, %v1081
        %v1092 = vsub.f32 %v1059, %v1084
        %v1093 = vmul.f32 %v1085, 1.442695
        %v1094 = vpow.pop %v1093
        %v1095 = vmul.f32 %v1086, 1.442695
        %v1096 = vpow.pop %v1095
        %v1097 = vmul.f32 %v1087, 1.442695
        %v1098 = vpow.pop %v1097
        %v1099 = vmul.f32 %v1088, 1.442695
        %v1100 = vpow.pop %v1099
        %v1101 = vmul.f32 %v1089, 1.442695
        %v1102 = vpow.pop %v1101
        %v1103 = vmul.f32 %v1090, 1.442695
        %v1104 = vpow.pop %v1103
        %v1105 = vmul.f32 %v1091, 1.442695
        %v1106 = vpow.pop %v1105
        %v1107 = vmul.f32 %v1092, 1.442695
        %v1108 = vpow.pop %v1107
        %v1109 = vsel %vm826, %v1094, 0.0
        %1110 = vadd.xlane.f32.xlu0 %v1109
        %v1111 = vpop.xlane.xlu0 %1110
        %v1112 = vsel %vm826, %v1096, 0.0
        %1113 = vadd.xlane.f32.xlu0 %v1112
        %v1114 = vpop.xlane.xlu0 %1113
        %v1115 = vsel %vm826, %v1098, 0.0
        %1116 = vadd.xlane.f32.xlu0 %v1115
        %v1117 = vpop.xlane.xlu0 %1116
        %v1118 = vsel %vm826, %v1100, 0.0
        %1119 = vadd.xlane.f32.xlu0 %v1118
        %v1120 = vpop.xlane.xlu0 %1119
        %v1121 = vsel %vm826, %v1102, 0.0
        %1122 = vadd.xlane.f32.xlu0 %v1121
        %v1123 = vpop.xlane.xlu0 %1122
        %v1124 = vsel %vm826, %v1104, 0.0
        %1125 = vadd.xlane.f32.xlu0 %v1124
        %v1126 = vpop.xlane.xlu0 %1125
        %v1127 = vsel %vm826, %v1106, 0.0
        %1128 = vadd.xlane.f32.xlu0 %v1127
        %v1129 = vpop.xlane.xlu0 %1128
        %v1130 = vsel %vm826, %v1108, 0.0
        %1131 = vadd.xlane.f32.xlu0 %v1130
        %v1132 = vpop.xlane.xlu0 %1131
        %v1133 = vrcp.pop %v1111
        %v1134 = vrcp.pop %v1114
        %v1135 = vrcp.pop %v1117
        %v1136 = vrcp.pop %v1120
        %v1137 = vrcp.pop %v1123
        %v1138 = vrcp.pop %v1126
        %v1139 = vrcp.pop %v1129
        %v1140 = vrcp.pop %v1132
        %v1141 = vmul.f32 %v1094, %v1133
        %v1142 = vmul.f32 %v1096, %v1134
        %v1143 = vmul.f32 %v1098, %v1135
        %v1144 = vmul.f32 %v1100, %v1136
        %v1145 = vmul.f32 %v1102, %v1137
        %v1146 = vmul.f32 %v1104, %v1138
        %v1147 = vmul.f32 %v1106, %v1139
        %v1148 = vmul.f32 %v1108, %v1140
        %v1149 = vpack.c.bf16 %v1142, %v1141
        %v1150 = vpack.c.bf16 %v1144, %v1143
        %v1151 = vpack.c.bf16 %v1146, %v1145
        %v1152 = vpack.c.bf16 %v1148, %v1147
        %1153 = vrot.lane.b32.xlu0 %v935, 96
        %v1154 = vpop.permute.xlu0 %1153
        %1155 = vrot.lane.b32.xlu0 %v936, 96
        %v1156 = vpop.permute.xlu0 %1155
        %1157 = vrot.lane.b32.xlu0 %v937, 96
        %v1158 = vpop.permute.xlu0 %1157
        %1159 = vrot.lane.b32.xlu0 %v938, 96
        %v1160 = vpop.permute.xlu0 %1159
        %v1166 = vsel %vm826, %v1149, 0
        %v1169 = vsel %vm826, %v1150, 0
        %v1172 = vsel %vm826, %v1151, 0
        %v1175 = vsel %vm826, %v1152, 0
        %1177 = vmatpush.bf16.msra.mxu0 0
        %1178 = vmatpush.bf16.msra.mxu0 0
        %1179 = vmatpush.bf16.msra.mxu0 0
        %1180 = vmatpush.bf16.msra.mxu0 0
        %1181 = vmatpush.bf16.msra.mxu0 %v1160
        %1182 = vmatpush.bf16.msra.mxu0 %v1158
        %1183 = vmatpush.bf16.msra.mxu0 %v1156
        %1184 = vmatpush.bf16.msra.mxu0 %v1154
        %1185 = vmatmul.bf16.gmra.mxu0 %v1166
        %v1186 = vpop.f32.mrf.mxu0
        %v1187 = vadd.f32 0.0, %v1186
        %v1188 = vpop.f32.mrf.mxu0
        %v1189 = vadd.f32 0.0, %v1188
        %1190 = vmatmul.bf16.gmra.mxu0 %v1169
        %v1191 = vpop.f32.mrf.mxu0
        %v1192 = vadd.f32 0.0, %v1191
        %v1193 = vpop.f32.mrf.mxu0
        %v1194 = vadd.f32 0.0, %v1193
        %1195 = vmatmul.bf16.gmra.mxu0 %v1172
        %v1196 = vpop.f32.mrf.mxu0
        %v1197 = vadd.f32 0.0, %v1196
        %v1198 = vpop.f32.mrf.mxu0
        %v1199 = vadd.f32 0.0, %v1198
        %1200 = vmatmul.bf16.gmra.mxu0 %v1175
        %v1201 = vpop.f32.mrf.mxu0
        %v1202 = vadd.f32 0.0, %v1201
        %v1203 = vpop.f32.mrf.mxu0
        %v1204 = vadd.f32 0.0, %v1203
        %1205 = vdwg.mxu0
        %1214 = vrot.lane.b32.xlu0 %v1187, 32
        %v1215 = vpop.permute.xlu0 %1214
        %1216 = vrot.lane.b32.xlu0 %v1189, 32
        %v1217 = vpop.permute.xlu0 %1216
        %1218 = vrot.lane.b32.xlu0 %v1192, 32
        %v1219 = vpop.permute.xlu0 %1218
        %1220 = vrot.lane.b32.xlu0 %v1194, 32
        %v1221 = vpop.permute.xlu0 %1220
        %1222 = vrot.lane.b32.xlu0 %v1197, 32
        %v1223 = vpop.permute.xlu0 %1222
        %1224 = vrot.lane.b32.xlu0 %v1199, 32
        %v1225 = vpop.permute.xlu0 %1224
        %1226 = vrot.lane.b32.xlu0 %v1202, 32
        %v1227 = vpop.permute.xlu0 %1226
        %1228 = vrot.lane.b32.xlu0 %v1204, 32
        %v1229 = vpop.permute.xlu0 %1228
        %vm1238 = vcmask 523520
        %1239 = vst.msk [vmem:[%s274] sm:$0xff] %vm1238, %v1215
        %1240 = vst.msk [vmem:[%s274 + $0x8] sm:$0xff] %vm1238, %v1217
        %1241 = vst.msk [vmem:[%s274 + $0x10] sm:$0xff] %vm1238, %v1219
        %1242 = vst.msk [vmem:[%s274 + $0x18] sm:$0xff] %vm1238, %v1221
        %1243 = vst.msk [vmem:[%s274 + $0x20] sm:$0xff] %vm1238, %v1223
        %1244 = vst.msk [vmem:[%s274 + $0x28] sm:$0xff] %vm1238, %v1225
        %1245 = vst.msk [vmem:[%s274 + $0x30] sm:$0xff] %vm1238, %v1227
        %1246 = vst.msk [vmem:[%s274 + $0x38] sm:$0xff] %vm1238, %v1229
        %1247 = vrot.lane.b32.xlu0 %v748, 64
        %v1248 = vpop.permute.xlu0 %1247
        %1249 = vrot.lane.b32.xlu0 %v749, 64
        %v1250 = vpop.permute.xlu0 %1249
        %1251 = vrot.lane.b32.xlu0 %v750, 64
        %v1252 = vpop.permute.xlu0 %1251
        %1253 = vrot.lane.b32.xlu0 %v751, 64
        %v1254 = vpop.permute.xlu0 %1253
        %1255 = vrot.lane.b32.xlu0 %v768, 64
        %v1256 = vpop.permute.xlu0 %1255
        %1257 = vrot.lane.b32.xlu0 %v769, 64
        %v1258 = vpop.permute.xlu0 %1257
        %1259 = vrot.lane.b32.xlu0 %v770, 64
        %v1260 = vpop.permute.xlu0 %1259
        %1261 = vrot.lane.b32.xlu0 %v771, 64
        %v1262 = vpop.permute.xlu0 %1261
        %v1264 = vsel %vm772, %v1248, 0
        %v1267 = vsel %vm772, %v1250, 0
        %v1270 = vsel %vm772, %v1252, 0
        %v1273 = vsel %vm772, %v1254, 0
        %v1276 = vsel %vm772, %v1256, 0
        %v1279 = vsel %vm772, %v1258, 0
        %v1282 = vsel %vm772, %v1260, 0
        %v1285 = vsel %vm772, %v1262, 0
        %1287 = vmatpush.bf16.xpose.msra.mxu0 0
        %1288 = vmatpush.bf16.xpose.msra.mxu0 0
        %1289 = vmatpush.bf16.xpose.msra.mxu0 0
        %1290 = vmatpush.bf16.xpose.msra.mxu0 0
        %1291 = vmatpush.bf16.xpose.msra.mxu0 %v1285
        %1292 = vmatpush.bf16.xpose.msra.mxu0 %v1282
        %1293 = vmatpush.bf16.xpose.msra.mxu0 %v1279
        %1294 = vmatpush.bf16.xpose.msra.mxu0 %v1276
        %1295 = vmatmul.bf16.gmra.mxu0 %v1264
        %v1296 = vpop.f32.mrf.mxu0
        %v1297 = vadd.f32 %v309, %v1296
        %v1298 = vpop.f32.mrf.mxu0
        %v1299 = vadd.f32 %v310, %v1298
        %1300 = vmatmul.bf16.gmra.mxu0 %v1267
        %v1301 = vpop.f32.mrf.mxu0
        %v1302 = vadd.f32 %v311, %v1301
        %v1303 = vpop.f32.mrf.mxu0
        %v1304 = vadd.f32 %v312, %v1303
        %1305 = vmatmul.bf16.gmra.mxu0 %v1270
        %v1306 = vpop.f32.mrf.mxu0
        %v1307 = vadd.f32 %v313, %v1306
        %v1308 = vpop.f32.mrf.mxu0
        %v1309 = vadd.f32 %v314, %v1308
        %1310 = vmatmul.bf16.gmra.mxu0 %v1273
        %v1311 = vpop.f32.mrf.mxu0
        %v1312 = vadd.f32 %v315, %v1311
        %v1313 = vpop.f32.mrf.mxu0
        %v1314 = vadd.f32 %v316, %v1313
        %1315 = vdwg.mxu0
        %v1316 = vsel %vm826, %v1297, -inf
        %1317 = vmax.xlane.f32.xlu0 %v1316
        %v1318 = vpop.xlane.xlu0 %1317
        %v1319 = vsel %vm826, %v1299, -inf
        %1320 = vmax.xlane.f32.xlu0 %v1319
        %v1321 = vpop.xlane.xlu0 %1320
        %v1322 = vsel %vm826, %v1302, -inf
        %1323 = vmax.xlane.f32.xlu0 %v1322
        %v1324 = vpop.xlane.xlu0 %1323
        %v1325 = vsel %vm826, %v1304, -inf
        %1326 = vmax.xlane.f32.xlu0 %v1325
        %v1327 = vpop.xlane.xlu0 %1326
        %v1328 = vsel %vm826, %v1307, -inf
        %1329 = vmax.xlane.f32.xlu0 %v1328
        %v1330 = vpop.xlane.xlu0 %1329
        %v1331 = vsel %vm826, %v1309, -inf
        %1332 = vmax.xlane.f32.xlu0 %v1331
        %v1333 = vpop.xlane.xlu0 %1332
        %v1334 = vsel %vm826, %v1312, -inf
        %1335 = vmax.xlane.f32.xlu0 %v1334
        %v1336 = vpop.xlane.xlu0 %1335
        %v1337 = vsel %vm826, %v1314, -inf
        %1338 = vmax.xlane.f32.xlu0 %v1337
        %v1339 = vpop.xlane.xlu0 %1338
        %v1340 = vsub.f32 %v1297, %v1318
        %v1341 = vsub.f32 %v1299, %v1321
        %v1342 = vsub.f32 %v1302, %v1324
        %v1343 = vsub.f32 %v1304, %v1327
        %v1344 = vsub.f32 %v1307, %v1330
        %v1345 = vsub.f32 %v1309, %v1333
        %v1346 = vsub.f32 %v1312, %v1336
        %v1347 = vsub.f32 %v1314, %v1339
        %v1348 = vmul.f32 %v1340, 1.442695
        %v1349 = vpow.pop %v1348
        %v1350 = vmul.f32 %v1341, 1.442695
        %v1351 = vpow.pop %v1350
        %v1352 = vmul.f32 %v1342, 1.442695
        %v1353 = vpow.pop %v1352
        %v1354 = vmul.f32 %v1343, 1.442695
        %v1355 = vpow.pop %v1354
        %v1356 = vmul.f32 %v1344, 1.442695
        %v1357 = vpow.pop %v1356
        %v1358 = vmul.f32 %v1345, 1.442695
        %v1359 = vpow.pop %v1358
        %v1360 = vmul.f32 %v1346, 1.442695
        %v1361 = vpow.pop %v1360
        %v1362 = vmul.f32 %v1347, 1.442695
        %v1363 = vpow.pop %v1362
        %v1364 = vsel %vm826, %v1349, 0.0
        %1365 = vadd.xlane.f32.xlu0 %v1364
        %v1366 = vpop.xlane.xlu0 %1365
        %v1367 = vsel %vm826, %v1351, 0.0
        %1368 = vadd.xlane.f32.xlu0 %v1367
        %v1369 = vpop.xlane.xlu0 %1368
        %v1370 = vsel %vm826, %v1353, 0.0
        %1371 = vadd.xlane.f32.xlu0 %v1370
        %v1372 = vpop.xlane.xlu0 %1371
        %v1373 = vsel %vm826, %v1355, 0.0
        %1374 = vadd.xlane.f32.xlu0 %v1373
        %v1375 = vpop.xlane.xlu0 %1374
        %v1376 = vsel %vm826, %v1357, 0.0
        %1377 = vadd.xlane.f32.xlu0 %v1376
        %v1378 = vpop.xlane.xlu0 %1377
        %v1379 = vsel %vm826, %v1359, 0.0
        %1380 = vadd.xlane.f32.xlu0 %v1379
        %v1381 = vpop.xlane.xlu0 %1380
        %v1382 = vsel %vm826, %v1361, 0.0
        %1383 = vadd.xlane.f32.xlu0 %v1382
        %v1384 = vpop.xlane.xlu0 %1383
        %v1385 = vsel %vm826, %v1363, 0.0
        %1386 = vadd.xlane.f32.xlu0 %v1385
        %v1387 = vpop.xlane.xlu0 %1386
        %v1388 = vrcp.pop %v1366
        %v1389 = vrcp.pop %v1369
        %v1390 = vrcp.pop %v1372
        %v1391 = vrcp.pop %v1375
        %v1392 = vrcp.pop %v1378
        %v1393 = vrcp.pop %v1381
        %v1394 = vrcp.pop %v1384
        %v1395 = vrcp.pop %v1387
        %v1396 = vmul.f32 %v1349, %v1388
        %v1397 = vmul.f32 %v1351, %v1389
        %v1398 = vmul.f32 %v1353, %v1390
        %v1399 = vmul.f32 %v1355, %v1391
        %v1400 = vmul.f32 %v1357, %v1392
        %v1401 = vmul.f32 %v1359, %v1393
        %v1402 = vmul.f32 %v1361, %v1394
        %v1403 = vmul.f32 %v1363, %v1395
        %v1404 = vpack.c.bf16 %v1397, %v1396
        %v1405 = vpack.c.bf16 %v1399, %v1398
        %v1406 = vpack.c.bf16 %v1401, %v1400
        %v1407 = vpack.c.bf16 %v1403, %v1402
        %1408 = vrot.lane.b32.xlu0 %v935, 64
        %v1409 = vpop.permute.xlu0 %1408
        %1410 = vrot.lane.b32.xlu0 %v936, 64
        %v1411 = vpop.permute.xlu0 %1410
        %1412 = vrot.lane.b32.xlu0 %v937, 64
        %v1413 = vpop.permute.xlu0 %1412
        %1414 = vrot.lane.b32.xlu0 %v938, 64
        %v1415 = vpop.permute.xlu0 %1414
        %v1421 = vsel %vm826, %v1404, 0
        %v1424 = vsel %vm826, %v1405, 0
        %v1427 = vsel %vm826, %v1406, 0
        %v1430 = vsel %vm826, %v1407, 0
        %1432 = vmatpush.bf16.msra.mxu0 0
        %1433 = vmatpush.bf16.msra.mxu0 0
        %1434 = vmatpush.bf16.msra.mxu0 0
        %1435 = vmatpush.bf16.msra.mxu0 0
        %1436 = vmatpush.bf16.msra.mxu0 %v1415
        %1437 = vmatpush.bf16.msra.mxu0 %v1413
        %1438 = vmatpush.bf16.msra.mxu0 %v1411
        %1439 = vmatpush.bf16.msra.mxu0 %v1409
        %1440 = vmatmul.bf16.gmra.mxu0 %v1421
        %v1441 = vpop.f32.mrf.mxu0
        %v1442 = vadd.f32 0.0, %v1441
        %v1443 = vpop.f32.mrf.mxu0
        %v1444 = vadd.f32 0.0, %v1443
        %1445 = vmatmul.bf16.gmra.mxu0 %v1424
        %v1446 = vpop.f32.mrf.mxu0
        %v1447 = vadd.f32 0.0, %v1446
        %v1448 = vpop.f32.mrf.mxu0
        %v1449 = vadd.f32 0.0, %v1448
        %1450 = vmatmul.bf16.gmra.mxu0 %v1427
        %v1451 = vpop.f32.mrf.mxu0
        %v1452 = vadd.f32 0.0, %v1451
        %v1453 = vpop.f32.mrf.mxu0
        %v1454 = vadd.f32 0.0, %v1453
        %1455 = vmatmul.bf16.gmra.mxu0 %v1430
        %v1456 = vpop.f32.mrf.mxu0
        %v1457 = vadd.f32 0.0, %v1456
        %v1458 = vpop.f32.mrf.mxu0
        %v1459 = vadd.f32 0.0, %v1458
        %1460 = vdwg.mxu0
        %1469 = vrot.lane.b32.xlu0 %v1442, 64
        %v1470 = vpop.permute.xlu0 %1469
        %1471 = vrot.lane.b32.xlu0 %v1444, 64
        %v1472 = vpop.permute.xlu0 %1471
        %1473 = vrot.lane.b32.xlu0 %v1447, 64
        %v1474 = vpop.permute.xlu0 %1473
        %1475 = vrot.lane.b32.xlu0 %v1449, 64
        %v1476 = vpop.permute.xlu0 %1475
        %1477 = vrot.lane.b32.xlu0 %v1452, 64
        %v1478 = vpop.permute.xlu0 %1477
        %1479 = vrot.lane.b32.xlu0 %v1454, 64
        %v1480 = vpop.permute.xlu0 %1479
        %1481 = vrot.lane.b32.xlu0 %v1457, 64
        %v1482 = vpop.permute.xlu0 %1481
        %1483 = vrot.lane.b32.xlu0 %v1459, 64
        %v1484 = vpop.permute.xlu0 %1483
        %vm1493 = vcmask 785920
        %1494 = vst.msk [vmem:[%s274] sm:$0xff] %vm1493, %v1470
        %1495 = vst.msk [vmem:[%s274 + $0x8] sm:$0xff] %vm1493, %v1472
        %1496 = vst.msk [vmem:[%s274 + $0x10] sm:$0xff] %vm1493, %v1474
        %1497 = vst.msk [vmem:[%s274 + $0x18] sm:$0xff] %vm1493, %v1476
        %1498 = vst.msk [vmem:[%s274 + $0x20] sm:$0xff] %vm1493, %v1478
        %1499 = vst.msk [vmem:[%s274 + $0x28] sm:$0xff] %vm1493, %v1480
        %1500 = vst.msk [vmem:[%s274 + $0x30] sm:$0xff] %vm1493, %v1482
        %1501 = vst.msk [vmem:[%s274 + $0x38] sm:$0xff] %vm1493, %v1484
        %1502 = vrot.lane.b32.xlu0 %v748, 32
        %v1503 = vpop.permute.xlu0 %1502
        %1504 = vrot.lane.b32.xlu0 %v749, 32
        %v1505 = vpop.permute.xlu0 %1504
        %1506 = vrot.lane.b32.xlu0 %v750, 32
        %v1507 = vpop.permute.xlu0 %1506
        %1508 = vrot.lane.b32.xlu0 %v751, 32
        %v1509 = vpop.permute.xlu0 %1508
        %1510 = vrot.lane.b32.xlu0 %v768, 32
        %v1511 = vpop.permute.xlu0 %1510
        %1512 = vrot.lane.b32.xlu0 %v769, 32
        %v1513 = vpop.permute.xlu0 %1512
        %1514 = vrot.lane.b32.xlu0 %v770, 32
        %v1515 = vpop.permute.xlu0 %1514
        %1516 = vrot.lane.b32.xlu0 %v771, 32
        %v1517 = vpop.permute.xlu0 %1516
        %v1519 = vsel %vm772, %v1503, 0
        %v1522 = vsel %vm772, %v1505, 0
        %v1525 = vsel %vm772, %v1507, 0
        %v1528 = vsel %vm772, %v1509, 0
        %v1531 = vsel %vm772, %v1511, 0
        %v1534 = vsel %vm772, %v1513, 0
        %v1537 = vsel %vm772, %v1515, 0
        %v1540 = vsel %vm772, %v1517, 0
        %1542 = vmatpush.bf16.xpose.msra.mxu0 0
        %1543 = vmatpush.bf16.xpose.msra.mxu0 0
        %1544 = vmatpush.bf16.xpose.msra.mxu0 0
        %1545 = vmatpush.bf16.xpose.msra.mxu0 0
        %1546 = vmatpush.bf16.xpose.msra.mxu0 %v1540
        %1547 = vmatpush.bf16.xpose.msra.mxu0 %v1537
        %1548 = vmatpush.bf16.xpose.msra.mxu0 %v1534
        %1549 = vmatpush.bf16.xpose.msra.mxu0 %v1531
        %1550 = vmatmul.bf16.gmra.mxu0 %v1519
        %v1551 = vpop.f32.mrf.mxu0
        %v1552 = vadd.f32 %v309, %v1551
        %v1553 = vpop.f32.mrf.mxu0
        %v1554 = vadd.f32 %v310, %v1553
        %1555 = vmatmul.bf16.gmra.mxu0 %v1522
        %v1556 = vpop.f32.mrf.mxu0
        %v1557 = vadd.f32 %v311, %v1556
        %v1558 = vpop.f32.mrf.mxu0
        %v1559 = vadd.f32 %v312, %v1558
        %1560 = vmatmul.bf16.gmra.mxu0 %v1525
        %v1561 = vpop.f32.mrf.mxu0
        %v1562 = vadd.f32 %v313, %v1561
        %v1563 = vpop.f32.mrf.mxu0
        %v1564 = vadd.f32 %v314, %v1563
        %1565 = vmatmul.bf16.gmra.mxu0 %v1528
        %v1566 = vpop.f32.mrf.mxu0
        %v1567 = vadd.f32 %v315, %v1566
        %v1568 = vpop.f32.mrf.mxu0
        %v1569 = vadd.f32 %v316, %v1568
        %1570 = vdwg.mxu0
        %v1571 = vsel %vm826, %v1552, -inf
        %1572 = vmax.xlane.f32.xlu0 %v1571
        %v1573 = vpop.xlane.xlu0 %1572
        %v1574 = vsel %vm826, %v1554, -inf
        %1575 = vmax.xlane.f32.xlu0 %v1574
        %v1576 = vpop.xlane.xlu0 %1575
        %v1577 = vsel %vm826, %v1557, -inf
        %1578 = vmax.xlane.f32.xlu0 %v1577
        %v1579 = vpop.xlane.xlu0 %1578
        %v1580 = vsel %vm826, %v1559, -inf
        %1581 = vmax.xlane.f32.xlu0 %v1580
        %v1582 = vpop.xlane.xlu0 %1581
        %v1583 = vsel %vm826, %v1562, -inf
        %1584 = vmax.xlane.f32.xlu0 %v1583
        %v1585 = vpop.xlane.xlu0 %1584
        %v1586 = vsel %vm826, %v1564, -inf
        %1587 = vmax.xlane.f32.xlu0 %v1586
        %v1588 = vpop.xlane.xlu0 %1587
        %v1589 = vsel %vm826, %v1567, -inf
        %1590 = vmax.xlane.f32.xlu0 %v1589
        %v1591 = vpop.xlane.xlu0 %1590
        %v1592 = vsel %vm826, %v1569, -inf
        %1593 = vmax.xlane.f32.xlu0 %v1592
        %v1594 = vpop.xlane.xlu0 %1593
        %v1595 = vsub.f32 %v1552, %v1573
        %v1596 = vsub.f32 %v1554, %v1576
        %v1597 = vsub.f32 %v1557, %v1579
        %v1598 = vsub.f32 %v1559, %v1582
        %v1599 = vsub.f32 %v1562, %v1585
        %v1600 = vsub.f32 %v1564, %v1588
        %v1601 = vsub.f32 %v1567, %v1591
        %v1602 = vsub.f32 %v1569, %v1594
        %v1603 = vmul.f32 %v1595, 1.442695
        %v1604 = vpow.pop %v1603
        %v1605 = vmul.f32 %v1596, 1.442695
        %v1606 = vpow.pop %v1605
        %v1607 = vmul.f32 %v1597, 1.442695
        %v1608 = vpow.pop %v1607
        %v1609 = vmul.f32 %v1598, 1.442695
        %v1610 = vpow.pop %v1609
        %v1611 = vmul.f32 %v1599, 1.442695
        %v1612 = vpow.pop %v1611
        %v1613 = vmul.f32 %v1600, 1.442695
        %v1614 = vpow.pop %v1613
        %v1615 = vmul.f32 %v1601, 1.442695
        %v1616 = vpow.pop %v1615
        %v1617 = vmul.f32 %v1602, 1.442695
        %v1618 = vpow.pop %v1617
        %v1619 = vsel %vm826, %v1604, 0.0
        %1620 = vadd.xlane.f32.xlu0 %v1619
        %v1621 = vpop.xlane.xlu0 %1620
        %v1622 = vsel %vm826, %v1606, 0.0
        %1623 = vadd.xlane.f32.xlu0 %v1622
        %v1624 = vpop.xlane.xlu0 %1623
        %v1625 = vsel %vm826, %v1608, 0.0
        %1626 = vadd.xlane.f32.xlu0 %v1625
        %v1627 = vpop.xlane.xlu0 %1626
        %v1628 = vsel %vm826, %v1610, 0.0
        %1629 = vadd.xlane.f32.xlu0 %v1628
        %v1630 = vpop.xlane.xlu0 %1629
        %v1631 = vsel %vm826, %v1612, 0.0
        %1632 = vadd.xlane.f32.xlu0 %v1631
        %v1633 = vpop.xlane.xlu0 %1632
        %v1634 = vsel %vm826, %v1614, 0.0
        %1635 = vadd.xlane.f32.xlu0 %v1634
        %v1636 = vpop.xlane.xlu0 %1635
        %v1637 = vsel %vm826, %v1616, 0.0
        %1638 = vadd.xlane.f32.xlu0 %v1637
        %v1639 = vpop.xlane.xlu0 %1638
        %v1640 = vsel %vm826, %v1618, 0.0
        %1641 = vadd.xlane.f32.xlu0 %v1640
        %v1642 = vpop.xlane.xlu0 %1641
        %v1643 = vrcp.pop %v1621
        %v1644 = vrcp.pop %v1624
        %v1645 = vrcp.pop %v1627
        %v1646 = vrcp.pop %v1630
        %v1647 = vrcp.pop %v1633
        %v1648 = vrcp.pop %v1636
        %v1649 = vrcp.pop %v1639
        %v1650 = vrcp.pop %v1642
        %v1651 = vmul.f32 %v1604, %v1643
        %v1652 = vmul.f32 %v1606, %v1644
        %v1653 = vmul.f32 %v1608, %v1645
        %v1654 = vmul.f32 %v1610, %v1646
        %v1655 = vmul.f32 %v1612, %v1647
        %v1656 = vmul.f32 %v1614, %v1648
        %v1657 = vmul.f32 %v1616, %v1649
        %v1658 = vmul.f32 %v1618, %v1650
        %v1659 = vpack.c.bf16 %v1652, %v1651
        %v1660 = vpack.c.bf16 %v1654, %v1653
        %v1661 = vpack.c.bf16 %v1656, %v1655
        %v1662 = vpack.c.bf16 %v1658, %v1657
        %1663 = vrot.lane.b32.xlu0 %v935, 32
        %v1664 = vpop.permute.xlu0 %1663
        %1665 = vrot.lane.b32.xlu0 %v936, 32
        %v1666 = vpop.permute.xlu0 %1665
        %1667 = vrot.lane.b32.xlu0 %v937, 32
        %v1668 = vpop.permute.xlu0 %1667
        %1669 = vrot.lane.b32.xlu0 %v938, 32
        %v1670 = vpop.permute.xlu0 %1669
        %v1676 = vsel %vm826, %v1659, 0
        %v1679 = vsel %vm826, %v1660, 0
        %v1682 = vsel %vm826, %v1661, 0
        %v1685 = vsel %vm826, %v1662, 0
        %1687 = vmatpush.bf16.msra.mxu0 0
        %1688 = vmatpush.bf16.msra.mxu0 0
        %1689 = vmatpush.bf16.msra.mxu0 0
        %1690 = vmatpush.bf16.msra.mxu0 0
        %1691 = vmatpush.bf16.msra.mxu0 %v1670
        %1692 = vmatpush.bf16.msra.mxu0 %v1668
        %1693 = vmatpush.bf16.msra.mxu0 %v1666
        %1694 = vmatpush.bf16.msra.mxu0 %v1664
        %1695 = vmatmul.bf16.gmra.mxu0 %v1676
        %v1696 = vpop.f32.mrf.mxu0
        %v1697 = vadd.f32 0.0, %v1696
        %v1698 = vpop.f32.mrf.mxu0
        %v1699 = vadd.f32 0.0, %v1698
        %1700 = vmatmul.bf16.gmra.mxu0 %v1679
        %v1701 = vpop.f32.mrf.mxu0
        %v1702 = vadd.f32 0.0, %v1701
        %v1703 = vpop.f32.mrf.mxu0
        %v1704 = vadd.f32 0.0, %v1703
        %1705 = vmatmul.bf16.gmra.mxu0 %v1682
        %v1706 = vpop.f32.mrf.mxu0
        %v1707 = vadd.f32 0.0, %v1706
        %v1708 = vpop.f32.mrf.mxu0
        %v1709 = vadd.f32 0.0, %v1708
        %1710 = vmatmul.bf16.gmra.mxu0 %v1685
        %v1711 = vpop.f32.mrf.mxu0
        %v1712 = vadd.f32 0.0, %v1711
        %v1713 = vpop.f32.mrf.mxu0
        %v1714 = vadd.f32 0.0, %v1713
        %1715 = vdwg.mxu0
        %1724 = vrot.lane.b32.xlu0 %v1697, 96
        %v1725 = vpop.permute.xlu0 %1724
        %1726 = vrot.lane.b32.xlu0 %v1699, 96
        %v1727 = vpop.permute.xlu0 %1726
        %1728 = vrot.lane.b32.xlu0 %v1702, 96
        %v1729 = vpop.permute.xlu0 %1728
        %1730 = vrot.lane.b32.xlu0 %v1704, 96
        %v1731 = vpop.permute.xlu0 %1730
        %1732 = vrot.lane.b32.xlu0 %v1707, 96
        %v1733 = vpop.permute.xlu0 %1732
        %1734 = vrot.lane.b32.xlu0 %v1709, 96
        %v1735 = vpop.permute.xlu0 %1734
        %1736 = vrot.lane.b32.xlu0 %v1712, 96
        %v1737 = vpop.permute.xlu0 %1736
        %1738 = vrot.lane.b32.xlu0 %v1714, 96
        %v1739 = vpop.permute.xlu0 %1738
        %vm1748 = vcmask 1048320
        %1749 = vst.msk [vmem:[%s274] sm:$0xff] %vm1748, %v1725
        %1750 = vst.msk [vmem:[%s274 + $0x8] sm:$0xff] %vm1748, %v1727
        %1751 = vst.msk [vmem:[%s274 + $0x10] sm:$0xff] %vm1748, %v1729
        %1752 = vst.msk [vmem:[%s274 + $0x18] sm:$0xff] %vm1748, %v1731
        %1753 = vst.msk [vmem:[%s274 + $0x20] sm:$0xff] %vm1748, %v1733
        %1754 = vst.msk [vmem:[%s274 + $0x28] sm:$0xff] %vm1748, %v1735
        %1755 = vst.msk [vmem:[%s274 + $0x30] sm:$0xff] %vm1748, %v1737
        %1756 = vst.msk [vmem:[%s274 + $0x38] sm:$0xff] %vm1748, %v1739
        %s1757 = sand.u32 %s169, 1
        %s1758 = scalar_lea.sflag [#allocation3], %s1757
        %s1759 = sand.u32 %s169, 1
        %s1760 = smul.addr %s1759, 64
        %s1761 = scalar_lea.vmem [#allocation2], %s1760
        // Predicated region
        $region45: #{mha_forward.1} parent=43 // pred_check
          %p1762 = pneg %p179
        $region46: #{mha_forward.1} parent=43 // pred_check_branch
          %1764 = sbr.rel (%p1762) target = $region48
        $region47: #{mha_forward.1} parent=43 // pred_region
          %1766 = vsyncadd %s1758, 0
          %s1767 = smul.addr %s20, 8
          %s1768 = smul.addr %s1767, 8
          %s1769 = scalar_lea.hbm %s6, %s1768
          %s1770 = sshll.u32 %s1761, 4
          %s1771 = int_to_ptr.vmem [resolvable:$true] %s1770
          %s1772 = sshll.u32 %s1769, 4
          %s1773 = int_to_ptr.hbm [resolvable:$true] %s1772
          %1778 = dma.vmem_to_hbm [thread:$0]  %s1771, 1024, %s1773, %s1758, 128, 128, 8
        $region48: #{mha_forward.1} parent=43 // pred_fallthru
          _
      $region44: #{mha_forward.1} parent=5 // pred_fallthru
        _
      %p1779 = scmp.le.s32.totalorder 2, %s15
      // Predicated region
      $region49: #{mha_forward.1} parent=5 // pred_check
        %p1780 = pneg %p1779
      $region50: #{mha_forward.1} parent=5 // pred_check_branch
        %1782 = sbr.rel (%p1780) target = $region52
      $region51: #{mha_forward.1} parent=5 // pred_region
        %s1783 = ssub.s32 %s15, 2
        // Predicated region
        $region53: #{mha_forward.1} parent=51 // pred_check
          %p1784 = pneg %p185
        $region54: #{mha_forward.1} parent=51 // pred_check_branch
          %1786 = sbr.rel (%p1784) target = $region56
        $region55: #{mha_forward.1} parent=51 // pred_region
          %s1787 = sand.u32 %s170, 1
          %s1788 = scalar_lea.sflag [#allocation3], %s1787
          %s1789 = sand.u32 %s170, 1
          %s1790 = smul.addr %s1789, 64
          %s1791 = scalar_lea.vmem [#allocation2], %s1790
          %1793 = dma.done %s1788, 1024
        $region56: #{mha_forward.1} parent=51 // pred_fallthru
          _
      $region52: #{mha_forward.1} parent=5 // pred_fallthru
        _
    $region6: #{mha_forward.1} parent=1 // loop_footer
      %s19 = sadd.s32 1, %s15
    $region7: #{mha_forward.1} parent=1 // loop_footer_branch
      %14 = sbr.rel target = $region3
    $region8: #{mha_forward.1} parent=1 // loop_exit
      _
    %1794 = vsyncpa [#allocation3], 1
    %s1795 = scalar_lea.sflag [#allocation3], 1
    %1796 = vsyncpa %s1795, 1

</llo_original>
